<compile_context>
chip_gen: v6e
topology: v6e:2x2x1
jax: 0.10.0
libtpu: 0.0.40
codegen_flags: <defaults>
</compile_context>

<pallas_src>
import functools

import jax
import jax.numpy as jnp
from jax.experimental import pallas as pl
from jax.experimental.pallas import tpu as pltpu


def _mlp_kernel(x_ref, w1t_ref, b1_ref, w2t_ref, b2_ref, w3c_ref, b3_ref, o_ref):
    # x_ref: (tm, 2) f32. Transpose in-kernel so the batch sits on the lane axis for the
    # whole pipeline and the output store is lane-dense.
    xt = jnp.transpose(x_ref[...])                                  # (2, tm)

    # ----- Layer 1 on the VPU: h1 = W1^T x + b1 -> (d_h, tm); ReLU; single bf16 copy -----
    h1 = jnp.maximum(
        w1t_ref[:, 0:1] * xt[0:1, :] + w1t_ref[:, 1:2] * xt[1:2, :] + b1_ref[...],
        0.0,
    ).astype(jnp.bfloat16)

    # ----- Layer 2 on the MXU (bf16 in, f32 accumulate): (d_h, d_h) @ (d_h, tm) -----
    h2 = jnp.maximum(
        jnp.dot(w2t_ref[...], h1, preferred_element_type=jnp.float32) + b2_ref[...],
        0.0,
    )

    # ----- Layer 3 (M=1) off the MXU: VPU multiply + XLU sublane reduce; bias from SMEM -----
    logits = jnp.sum(h2 * w3c_ref[...], axis=0, keepdims=True) + b3_ref[0, 0]

    o_ref[...] = jax.nn.sigmoid(logits).astype(o_ref.dtype)        # lane-dense (1, tm) store


def _round_up(n, m):
    return ((n + m - 1) // m) * m


def _choose_tiling(n, tm_cap):
    """Pick (tm, grid) with tm a multiple of 128 and tm*grid >= n (minimal padding)."""
    n128 = _round_up(n, 128)
    if n128 <= tm_cap:
        # Batch fits in one or two tiles. Split into 2 when large enough so v7x megacore
        # (dimension_semantics="parallel") can use both TensorCores.
        if n128 >= 2048 and (n128 // 2) % 128 == 0:
            return n128 // 2, 2
        return n128, 1
    grid = -(-n128 // tm_cap)
    tm = _round_up(-(-n128 // grid), 128)
    return tm, grid


def prepare_params(params):
    """One-time conversion of PyTorch-layout params into the kernel-facing layout."""
    d_h = params["w1"].shape[1]
    return {
        "w1t": jnp.asarray(params["w1"], jnp.float32).T,                         # (d_h, 2)  VPU
        "b1": jnp.asarray(params["b1"], jnp.float32).reshape(d_h, 1),            # (d_h, 1)
        "w2t": jnp.asarray(params["w2"], jnp.float32).T.astype(jnp.bfloat16),    # (d_h, d_h) MXU
        "b2": jnp.asarray(params["b2"], jnp.float32).reshape(d_h, 1),            # (d_h, 1)
        "w3c": jnp.asarray(params["w3"], jnp.float32).reshape(d_h, 1),           # (d_h, 1)  VPU/XLU
        "b3": jnp.asarray(params["b3"], jnp.float32).reshape(1, 1),              # scalar, SMEM
    }


@functools.partial(jax.jit, static_argnames=("tm_cap",))
def discriminator_b1_forward(x, prepped, *, tm_cap=4096):
    """x: (N, 2) float32. prepped: output of prepare_params (kernel-layout weights)."""
    N, d_in = x.shape
    assert d_in == 2
    d_h = prepped["w1t"].shape[0]

    tm, grid_n = _choose_tiling(N, tm_cap)
    n_pad = tm * grid_n

    xp = x.astype(jnp.float32)
    if n_pad != N:  # tail-align only; no transpose, no full-batch round trip
        xp = jnp.pad(xp, ((0, n_pad - N), (0, 0)))

    in_specs = [
        pl.BlockSpec((tm, 2), lambda i: (i, 0)),                 # x tile (transposed in-kernel)
        pl.BlockSpec((d_h, 2), lambda i: (0, 0)),                # w1^T (resident)
        pl.BlockSpec((d_h, 1), lambda i: (0, 0)),                # b1
        pl.BlockSpec((d_h, d_h), lambda i: (0, 0)),              # w2^T (resident, bf16)
        pl.BlockSpec((d_h, 1), lambda i: (0, 0)),                # b2
        pl.BlockSpec((d_h, 1), lambda i: (0, 0)),                # w3 column
        pl.BlockSpec(memory_space=pltpu.MemorySpace.SMEM),       # b3 scalar
    ]
    out_spec = pl.BlockSpec((1, tm), lambda i: (0, i))           # lane-dense output row

    out_t = pl.pallas_call(
        _mlp_kernel,
        out_shape=jax.ShapeDtypeStruct((1, n_pad), jnp.float32),
        grid_spec=pltpu.PrefetchScalarGridSpec(
            num_scalar_prefetch=0,
            grid=(grid_n,),
            in_specs=in_specs,
            out_specs=out_spec,
        ),
        compiler_params=pltpu.CompilerParams(
            dimension_semantics=("parallel",),       # shards grid steps across TCs on v7x
            vmem_limit_bytes=32 * 1024 * 1024,       # ~6 MiB working set at tm=4096; v5e needs >16 MiB default
        ),
    )(xp, prepped["w1t"], prepped["b1"], prepped["w2t"], prepped["b2"],
      prepped["w3c"], prepped["b3"])

    return out_t[0, :N].reshape(N, 1)


def init_params(key, d_h=128):
    """Deterministic init mimicking nn.Linear's uniform(-1/sqrt(fan_in), 1/sqrt(fan_in))."""
    keys = jax.random.split(key, 6)

    def linear(kw, kb, fan_in, fan_out):
        bound = 1.0 / jnp.sqrt(fan_in)
        w = jax.random.uniform(kw, (fan_in, fan_out), jnp.float32, -bound, bound)
        b = jax.random.uniform(kb, (1, fan_out), jnp.float32, -bound, bound)
        return w, b

    w1, b1 = linear(keys[0], keys[1], 2, d_h)
    w2, b2 = linear(keys[2], keys[3], d_h, d_h)
    w3, b3 = linear(keys[4], keys[5], d_h, 1)
    return {"w1": w1, "b1": b1, "w2": w2, "b2": b2, "w3": w3, "b3": b3}


def reference_forward(x, p):
    h1 = jnp.maximum(x @ p["w1"] + p["b1"], 0.0)
    h2 = jnp.maximum(h1 @ p["w2"] + p["b2"], 0.0)
    return jax.nn.sigmoid(h2 @ p["w3"] + p["b3"])


if __name__ == "__main__":
    key = jax.random.PRNGKey(0)
    k_x, k_p = jax.random.split(key)

    d_h = 128
    N = 1000                                 # non-multiple of 128: exercises tail padding
    x = jax.random.normal(k_x, (N, 2), jnp.float32)
    params = init_params(k_p, d_h=d_h)
    prepped = prepare_params(params)         # one-time layout conversion (outside the forward)

    ref = reference_forward(x, params)

    # Single-tile path (grid=(1,), tm = round_up(N,128)).
    out = jax.block_until_ready(discriminator_b1_forward(x, prepped))
    assert out.shape == (N, 1)
    # bf16 MXU operands in layer 2 (f32 accumulation) vs f32 reference -> loosened tolerance.
    assert jnp.allclose(out, ref, atol=2e-2, rtol=2e-2), "mismatch vs. pure-JAX reference (grid=1)"

    # Multi-tile path (grid=(2,), tm=512) to exercise the pipelined grid as well.
    out2 = jax.block_until_ready(discriminator_b1_forward(x, prepped, tm_cap=512))
    assert jnp.allclose(out2, ref, atol=2e-2, rtol=2e-2), "mismatch vs. pure-JAX reference (grid>1)"

    print("KERNEL_OK")
</pallas_src>

<mosaic_0001>
module attributes {stable_mosaic.version = 11 : i64} {
  func.func @_mlp_kernel(%arg0: i32, %arg1: memref<1024x2xf32, #tpu.memory_space<vmem>>, %arg2: memref<128x2xf32, #tpu.memory_space<vmem>>, %arg3: memref<128x1xf32, #tpu.memory_space<vmem>>, %arg4: memref<128x128xbf16, #tpu.memory_space<vmem>>, %arg5: memref<128x1xf32, #tpu.memory_space<vmem>>, %arg6: memref<128x1xf32, #tpu.memory_space<vmem>>, %arg7: memref<1x1xf32, #tpu.memory_space<smem>>, %arg8: memref<1x1024xf32, #tpu.memory_space<vmem>>) attributes {dimension_semantics = [#tpu.dimension_semantics<parallel>], iteration_bounds = array<i64: 1>, scalar_prefetch = 0 : i64, scratch_operands = 0 : i64, tpu.core_type = #tpu.core_type<tc>, window_params = [{transform_indices = @transform_0, window_bounds = array<i64: 1024, 2>}, {pipeline_mode = #tpu.pipeline_mode<synchronous>, transform_indices = @transform_1, window_bounds = array<i64: 128, 2>}, {pipeline_mode = #tpu.pipeline_mode<synchronous>, transform_indices = @transform_2, window_bounds = array<i64: 128, 1>}, {pipeline_mode = #tpu.pipeline_mode<synchronous>, transform_indices = @transform_3, window_bounds = array<i64: 128, 128>}, {pipeline_mode = #tpu.pipeline_mode<synchronous>, transform_indices = @transform_4, window_bounds = array<i64: 128, 1>}, {pipeline_mode = #tpu.pipeline_mode<synchronous>, transform_indices = @transform_5, window_bounds = array<i64: 128, 1>}, {transform_indices = @transform_6, window_bounds = array<i64: 1, 1>}, {transform_indices = @transform_7, window_bounds = array<i64: 1, 1024>}]} {
    %c0 = arith.constant 0 : index
    %c0_0 = arith.constant 0 : index
    %0 = vector.load %arg1[%c0, %c0_0] : memref<1024x2xf32, #tpu.memory_space<vmem>>, vector<1024x2xf32>
    %1 = tpu.transpose %0, [1, 0] : vector<1024x2xf32> -> vector<2x1024xf32>
    %c0_1 = arith.constant 0 : index
    %c0_2 = arith.constant 0 : index
    %2 = vector.load %arg2[%c0_1, %c0_2] : memref<128x2xf32, #tpu.memory_space<vmem>>, vector<128x1xf32>
    %3 = vector.extract_strided_slice %1 {offsets = [0, 0], sizes = [1, 1024], strides = [1, 1]} : vector<2x1024xf32> to vector<1x1024xf32>
    %4 = vector.broadcast %2 : vector<128x1xf32> to vector<128x1024xf32>
    %5 = vector.broadcast %3 : vector<1x1024xf32> to vector<128x1024xf32>
    %6 = arith.mulf %4, %5 : vector<128x1024xf32>
    %c0_3 = arith.constant 0 : index
    %c1 = arith.constant 1 : index
    %7 = vector.load %arg2[%c0_3, %c1] : memref<128x2xf32, #tpu.memory_space<vmem>>, vector<128x1xf32>
    %8 = vector.extract_strided_slice %1 {offsets = [1, 0], sizes = [1, 1024], strides = [1, 1]} : vector<2x1024xf32> to vector<1x1024xf32>
    %9 = vector.broadcast %7 : vector<128x1xf32> to vector<128x1024xf32>
    %10 = vector.broadcast %8 : vector<1x1024xf32> to vector<128x1024xf32>
    %11 = arith.mulf %9, %10 : vector<128x1024xf32>
    %12 = arith.addf %6, %11 : vector<128x1024xf32>
    %c0_4 = arith.constant 0 : index
    %c0_5 = arith.constant 0 : index
    %13 = vector.load %arg3[%c0_4, %c0_5] : memref<128x1xf32, #tpu.memory_space<vmem>>, vector<128x1xf32>
    %14 = vector.broadcast %13 : vector<128x1xf32> to vector<128x1024xf32>
    %15 = arith.addf %12, %14 : vector<128x1024xf32>
    %cst = arith.constant 0.000000e+00 : f32
    %16 = vector.broadcast %cst : f32 to vector<128x1024xf32>
    %17 = arith.maximumf %15, %16 : vector<128x1024xf32>
    %18 = arith.truncf %17 : vector<128x1024xf32> to vector<128x1024xbf16>
    %c0_6 = arith.constant 0 : index
    %c0_7 = arith.constant 0 : index
    %19 = vector.load %arg4[%c0_6, %c0_7] : memref<128x128xbf16, #tpu.memory_space<vmem>>, vector<128x128xbf16>
    %cst_8 = arith.constant dense<0.000000e+00> : vector<128x1024xf32>
    %20 = tpu.matmul %19, %18, %cst_8 {dimension_numbers = #tpu.dot_dimension_numbers<[1], [0], [0], [1], [0, 0, 1, 1], [], []>} : vector<128x128xbf16>, vector<128x1024xbf16>, vector<128x1024xf32> -> vector<128x1024xf32>
    %c0_9 = arith.constant 0 : index
    %c0_10 = arith.constant 0 : index
    %21 = vector.load %arg5[%c0_9, %c0_10] : memref<128x1xf32, #tpu.memory_space<vmem>>, vector<128x1xf32>
    %22 = vector.broadcast %21 : vector<128x1xf32> to vector<128x1024xf32>
    %23 = arith.addf %20, %22 : vector<128x1024xf32>
    %cst_11 = arith.constant 0.000000e+00 : f32
    %24 = vector.broadcast %cst_11 : f32 to vector<128x1024xf32>
    %25 = arith.maximumf %23, %24 : vector<128x1024xf32>
    %c0_12 = arith.constant 0 : index
    %c0_13 = arith.constant 0 : index
    %26 = vector.load %arg6[%c0_12, %c0_13] : memref<128x1xf32, #tpu.memory_space<vmem>>, vector<128x1xf32>
    %27 = vector.broadcast %26 : vector<128x1xf32> to vector<128x1024xf32>
    %28 = arith.mulf %25, %27 : vector<128x1024xf32>
    %cst_14 = arith.constant dense<0.000000e+00> : vector<1024xf32>
    %29 = vector.multi_reduction <add>, %28, %cst_14 [0] : vector<128x1024xf32> to vector<1024xf32>
    %30 = vector.shape_cast %29 : vector<1024xf32> to vector<1x1024xf32>
    %c0_15 = arith.constant 0 : index
    %c0_16 = arith.constant 0 : index
    %31 = memref.load %arg7[%c0_15, %c0_16] : memref<1x1xf32, #tpu.memory_space<smem>>
    %32 = vector.broadcast %31 : f32 to vector<1x1024xf32>
    %33 = arith.addf %30, %32 : vector<1x1024xf32>
    %34 = arith.negf %33 : vector<1x1024xf32>
    %35 = math.exp %34 : vector<1x1024xf32>
    %cst_17 = arith.constant 1.000000e+00 : f32
    %36 = vector.broadcast %cst_17 : f32 to vector<1x1024xf32>
    %37 = arith.addf %36, %35 : vector<1x1024xf32>
    %38 = arith.divf %36, %37 : vector<1x1024xf32>
    %c0_18 = arith.constant 0 : index
    %c0_19 = arith.constant 0 : index
    %39 = vector.load %arg8[%c0_18, %c0_19] : memref<1x1024xf32, #tpu.memory_space<vmem>>, vector<1x1024xf32>
    tpu.vector_store %arg8[%c0_18, %c0_19], %38 {strides = array<i32>} : memref<1x1024xf32, #tpu.memory_space<vmem>>, vector<1x1024xf32>,
    return
  }
  func.func @transform_0(%arg0: i32) -> (i32, i32) {
    %c0_i32 = arith.constant 0 : i32
    %c0_i32_0 = arith.constant 0 : i32
    return %arg0, %c0_i32 : i32, i32
  }
  func.func @transform_1(%arg0: i32) -> (i32, i32) {
    %c0_i32 = arith.constant 0 : i32
    %c0_i32_0 = arith.constant 0 : i32
    %c0_i32_1 = arith.constant 0 : i32
    return %c0_i32, %c0_i32_0 : i32, i32
  }
  func.func @transform_2(%arg0: i32) -> (i32, i32) {
    %c0_i32 = arith.constant 0 : i32
    %c0_i32_0 = arith.constant 0 : i32
    %c0_i32_1 = arith.constant 0 : i32
    return %c0_i32, %c0_i32_0 : i32, i32
  }
  func.func @transform_3(%arg0: i32) -> (i32, i32) {
    %c0_i32 = arith.constant 0 : i32
    %c0_i32_0 = arith.constant 0 : i32
    %c0_i32_1 = arith.constant 0 : i32
    return %c0_i32, %c0_i32_0 : i32, i32
  }
  func.func @transform_4(%arg0: i32) -> (i32, i32) {
    %c0_i32 = arith.constant 0 : i32
    %c0_i32_0 = arith.constant 0 : i32
    %c0_i32_1 = arith.constant 0 : i32
    return %c0_i32, %c0_i32_0 : i32, i32
  }
  func.func @transform_5(%arg0: i32) -> (i32, i32) {
    %c0_i32 = arith.constant 0 : i32
    %c0_i32_0 = arith.constant 0 : i32
    %c0_i32_1 = arith.constant 0 : i32
    return %c0_i32, %c0_i32_0 : i32, i32
  }
  func.func @transform_6(%arg0: i32) -> (i32, i32) {
    %c0_i32 = arith.constant 0 : i32
    %c0_i32_0 = arith.constant 0 : i32
    %c0_i32_1 = arith.constant 0 : i32
    return %c0_i32, %c0_i32_0 : i32, i32
  }
  func.func @transform_7(%arg0: i32) -> (i32, i32) {
    %c0_i32 = arith.constant 0 : i32
    %c0_i32_0 = arith.constant 0 : i32
    return %c0_i32, %arg0 : i32, i32
  }
}

</mosaic_0001>

<llo_original>
// kernel: discriminator_b1_forward.1
$region0: #{discriminator_b1_forward.1}
  #allocation0 [shape = 'u32[]', space=smem, size = 0x4, offset = 0x4, fixed_abs, tag = 'smem constant byte address 0x4 - core index']
  #allocation1 [shape = 'u32[144,128]{1,0:T(1,128)}', space=vmem, size = 0x12000, scoped, tag = 'internal scratch']
  #allocation2 [shape = 'f32[1,1]{1,0:T(1,128)S(6)}', space=smem, size = 0x200, scoped, tag = 'scoped memory for discriminator_b1_forward.1']
  %s0 = inlined_call_operand.vmem [shape: f32[1024,2], index: 0, kind: input, shape index: {}]
  %s1 = inlined_call_operand.vmem [shape: f32[128,2], index: 1, kind: input, shape index: {}]
  %s2 = inlined_call_operand.vmem [shape: f32[128,1], index: 2, kind: input, shape index: {}]
  %s3 = inlined_call_operand.vmem [shape: bf16[128,128], index: 3, kind: input, shape index: {}]
  %s4 = inlined_call_operand.vmem [shape: f32[128,1], index: 4, kind: input, shape index: {}]
  %s5 = inlined_call_operand.vmem [shape: f32[128,1], index: 5, kind: input, shape index: {}]
  %s6 = inlined_call_operand.<no memory space> [shape: f32[1,1], index: 6, kind: input, shape index: {}]
  %s7 = inlined_call_operand.vmem [shape: f32[1,1024], index: 7, kind: output, shape index: {}]
  %s8 = sld [smem:[#allocation0]]
  $region38: #{discriminator_b1_forward.1} parent=0
    _
  %s10 = ssub.s32 1, %s8
  %s11 = scalar_select 0, %s10, %s8
  %12 = sst [smem:[#allocation2]] %s6
  // Predicated region
  $region2: #{discriminator_b1_forward.1} parent=0 // pred_check
    _
  $region3: #{discriminator_b1_forward.1} parent=0 // pred_check_branch
    %14 = sbr.rel (0) target = $region5
  $region4: #{discriminator_b1_forward.1} parent=0 // pred_region
    _
  $region5: #{discriminator_b1_forward.1} parent=0 // pred_fallthru
    _
  // Predicated region
  $region6: #{discriminator_b1_forward.1} parent=0 // pred_check
    _
  $region7: #{discriminator_b1_forward.1} parent=0 // pred_check_branch
    %16 = sbr.rel (0) target = $region9
  $region8: #{discriminator_b1_forward.1} parent=0 // pred_region
    _
  $region9: #{discriminator_b1_forward.1} parent=0 // pred_fallthru
    _
  // Predicated region
  $region10: #{discriminator_b1_forward.1} parent=0 // pred_check
    _
  $region11: #{discriminator_b1_forward.1} parent=0 // pred_check_branch
    %18 = sbr.rel (0) target = $region13
  $region12: #{discriminator_b1_forward.1} parent=0 // pred_region
    _
  $region13: #{discriminator_b1_forward.1} parent=0 // pred_fallthru
    _
  // Predicated region
  $region14: #{discriminator_b1_forward.1} parent=0 // pred_check
    _
  $region15: #{discriminator_b1_forward.1} parent=0 // pred_check_branch
    %20 = sbr.rel (0) target = $region17
  $region16: #{discriminator_b1_forward.1} parent=0 // pred_region
    _
  $region17: #{discriminator_b1_forward.1} parent=0 // pred_fallthru
    _
  // Predicated region
  $region18: #{discriminator_b1_forward.1} parent=0 // pred_check
    _
  $region19: #{discriminator_b1_forward.1} parent=0 // pred_check_branch
    %22 = sbr.rel (0) target = $region21
  $region20: #{discriminator_b1_forward.1} parent=0 // pred_region
    _
  $region21: #{discriminator_b1_forward.1} parent=0 // pred_fallthru
    _
  // Predicated region
  $region22: #{discriminator_b1_forward.1} parent=0 // pred_check
    _
  $region23: #{discriminator_b1_forward.1} parent=0 // pred_check_branch
    %24 = sbr.rel (0) target = $region25
  $region24: #{discriminator_b1_forward.1} parent=0 // pred_region
    _
  $region25: #{discriminator_b1_forward.1} parent=0 // pred_fallthru
    _
  // Predicated region
  $region26: #{discriminator_b1_forward.1} parent=0 // pred_check
    _
  $region27: #{discriminator_b1_forward.1} parent=0 // pred_check_branch
    %26 = sbr.rel (0) target = $region29
  $region28: #{discriminator_b1_forward.1} parent=0 // pred_region
    _
  $region29: #{discriminator_b1_forward.1} parent=0 // pred_fallthru
    _
  %v28 = vld [vmem:[%s0] sm:$0xff]
  %v29 = vld [vmem:[%s0 + $0x8] sm:$0xff]
  %v30 = vld [vmem:[%s0 + $0x10] sm:$0xff]
  %v31 = vld [vmem:[%s0 + $0x18] sm:$0xff]
  %v32 = vld [vmem:[%s0 + $0x20] sm:$0xff]
  %v33 = vld [vmem:[%s0 + $0x28] sm:$0xff]
  %v34 = vld [vmem:[%s0 + $0x30] sm:$0xff]
  %v35 = vld [vmem:[%s0 + $0x38] sm:$0xff]
  %v36 = vld [vmem:[%s0 + $0x40] sm:$0xff]
  %v37 = vld [vmem:[%s0 + $0x48] sm:$0xff]
  %v38 = vld [vmem:[%s0 + $0x50] sm:$0xff]
  %v39 = vld [vmem:[%s0 + $0x58] sm:$0xff]
  %v40 = vld [vmem:[%s0 + $0x60] sm:$0xff]
  %v41 = vld [vmem:[%s0 + $0x68] sm:$0xff]
  %v42 = vld [vmem:[%s0 + $0x70] sm:$0xff]
  %v43 = vld [vmem:[%s0 + $0x78] sm:$0xff]
  %v44 = vld [vmem:[%s0 + $0x80] sm:$0xff]
  %v45 = vld [vmem:[%s0 + $0x88] sm:$0xff]
  %v46 = vld [vmem:[%s0 + $0x90] sm:$0xff]
  %v47 = vld [vmem:[%s0 + $0x98] sm:$0xff]
  %v48 = vld [vmem:[%s0 + $0xa0] sm:$0xff]
  %v49 = vld [vmem:[%s0 + $0xa8] sm:$0xff]
  %v50 = vld [vmem:[%s0 + $0xb0] sm:$0xff]
  %v51 = vld [vmem:[%s0 + $0xb8] sm:$0xff]
  %v52 = vld [vmem:[%s0 + $0xc0] sm:$0xff]
  %v53 = vld [vmem:[%s0 + $0xc8] sm:$0xff]
  %v54 = vld [vmem:[%s0 + $0xd0] sm:$0xff]
  %v55 = vld [vmem:[%s0 + $0xd8] sm:$0xff]
  %v56 = vld [vmem:[%s0 + $0xe0] sm:$0xff]
  %v57 = vld [vmem:[%s0 + $0xe8] sm:$0xff]
  %v58 = vld [vmem:[%s0 + $0xf0] sm:$0xff]
  %v59 = vld [vmem:[%s0 + $0xf8] sm:$0xff]
  %v60 = vld [vmem:[%s0 + $0x100] sm:$0xff]
  %v61 = vld [vmem:[%s0 + $0x108] sm:$0xff]
  %v62 = vld [vmem:[%s0 + $0x110] sm:$0xff]
  %v63 = vld [vmem:[%s0 + $0x118] sm:$0xff]
  %v64 = vld [vmem:[%s0 + $0x120] sm:$0xff]
  %v65 = vld [vmem:[%s0 + $0x128] sm:$0xff]
  %v66 = vld [vmem:[%s0 + $0x130] sm:$0xff]
  %v67 = vld [vmem:[%s0 + $0x138] sm:$0xff]
  %v68 = vld [vmem:[%s0 + $0x140] sm:$0xff]
  %v69 = vld [vmem:[%s0 + $0x148] sm:$0xff]
  %v70 = vld [vmem:[%s0 + $0x150] sm:$0xff]
  %v71 = vld [vmem:[%s0 + $0x158] sm:$0xff]
  %v72 = vld [vmem:[%s0 + $0x160] sm:$0xff]
  %v73 = vld [vmem:[%s0 + $0x168] sm:$0xff]
  %v74 = vld [vmem:[%s0 + $0x170] sm:$0xff]
  %v75 = vld [vmem:[%s0 + $0x178] sm:$0xff]
  %v76 = vld [vmem:[%s0 + $0x180] sm:$0xff]
  %v77 = vld [vmem:[%s0 + $0x188] sm:$0xff]
  %v78 = vld [vmem:[%s0 + $0x190] sm:$0xff]
  %v79 = vld [vmem:[%s0 + $0x198] sm:$0xff]
  %v80 = vld [vmem:[%s0 + $0x1a0] sm:$0xff]
  %v81 = vld [vmem:[%s0 + $0x1a8] sm:$0xff]
  %v82 = vld [vmem:[%s0 + $0x1b0] sm:$0xff]
  %v83 = vld [vmem:[%s0 + $0x1b8] sm:$0xff]
  %v84 = vld [vmem:[%s0 + $0x1c0] sm:$0xff]
  %v85 = vld [vmem:[%s0 + $0x1c8] sm:$0xff]
  %v86 = vld [vmem:[%s0 + $0x1d0] sm:$0xff]
  %v87 = vld [vmem:[%s0 + $0x1d8] sm:$0xff]
  %v88 = vld [vmem:[%s0 + $0x1e0] sm:$0xff]
  %v89 = vld [vmem:[%s0 + $0x1e8] sm:$0xff]
  %v90 = vld [vmem:[%s0 + $0x1f0] sm:$0xff]
  %v91 = vld [vmem:[%s0 + $0x1f8] sm:$0xff]
  %v92 = vld [vmem:[%s0 + $0x200] sm:$0xff]
  %v93 = vld [vmem:[%s0 + $0x208] sm:$0xff]
  %v94 = vld [vmem:[%s0 + $0x210] sm:$0xff]
  %v95 = vld [vmem:[%s0 + $0x218] sm:$0xff]
  %v96 = vld [vmem:[%s0 + $0x220] sm:$0xff]
  %v97 = vld [vmem:[%s0 + $0x228] sm:$0xff]
  %v98 = vld [vmem:[%s0 + $0x230] sm:$0xff]
  %v99 = vld [vmem:[%s0 + $0x238] sm:$0xff]
  %v100 = vld [vmem:[%s0 + $0x240] sm:$0xff]
  %v101 = vld [vmem:[%s0 + $0x248] sm:$0xff]
  %v102 = vld [vmem:[%s0 + $0x250] sm:$0xff]
  %v103 = vld [vmem:[%s0 + $0x258] sm:$0xff]
  %v104 = vld [vmem:[%s0 + $0x260] sm:$0xff]
  %v105 = vld [vmem:[%s0 + $0x268] sm:$0xff]
  %v106 = vld [vmem:[%s0 + $0x270] sm:$0xff]
  %v107 = vld [vmem:[%s0 + $0x278] sm:$0xff]
  %v108 = vld [vmem:[%s0 + $0x280] sm:$0xff]
  %v109 = vld [vmem:[%s0 + $0x288] sm:$0xff]
  %v110 = vld [vmem:[%s0 + $0x290] sm:$0xff]
  %v111 = vld [vmem:[%s0 + $0x298] sm:$0xff]
  %v112 = vld [vmem:[%s0 + $0x2a0] sm:$0xff]
  %v113 = vld [vmem:[%s0 + $0x2a8] sm:$0xff]
  %v114 = vld [vmem:[%s0 + $0x2b0] sm:$0xff]
  %v115 = vld [vmem:[%s0 + $0x2b8] sm:$0xff]
  %v116 = vld [vmem:[%s0 + $0x2c0] sm:$0xff]
  %v117 = vld [vmem:[%s0 + $0x2c8] sm:$0xff]
  %v118 = vld [vmem:[%s0 + $0x2d0] sm:$0xff]
  %v119 = vld [vmem:[%s0 + $0x2d8] sm:$0xff]
  %v120 = vld [vmem:[%s0 + $0x2e0] sm:$0xff]
  %v121 = vld [vmem:[%s0 + $0x2e8] sm:$0xff]
  %v122 = vld [vmem:[%s0 + $0x2f0] sm:$0xff]
  %v123 = vld [vmem:[%s0 + $0x2f8] sm:$0xff]
  %v124 = vld [vmem:[%s0 + $0x300] sm:$0xff]
  %v125 = vld [vmem:[%s0 + $0x308] sm:$0xff]
  %v126 = vld [vmem:[%s0 + $0x310] sm:$0xff]
  %v127 = vld [vmem:[%s0 + $0x318] sm:$0xff]
  %v128 = vld [vmem:[%s0 + $0x320] sm:$0xff]
  %v129 = vld [vmem:[%s0 + $0x328] sm:$0xff]
  %v130 = vld [vmem:[%s0 + $0x330] sm:$0xff]
  %v131 = vld [vmem:[%s0 + $0x338] sm:$0xff]
  %v132 = vld [vmem:[%s0 + $0x340] sm:$0xff]
  %v133 = vld [vmem:[%s0 + $0x348] sm:$0xff]
  %v134 = vld [vmem:[%s0 + $0x350] sm:$0xff]
  %v135 = vld [vmem:[%s0 + $0x358] sm:$0xff]
  %v136 = vld [vmem:[%s0 + $0x360] sm:$0xff]
  %v137 = vld [vmem:[%s0 + $0x368] sm:$0xff]
  %v138 = vld [vmem:[%s0 + $0x370] sm:$0xff]
  %v139 = vld [vmem:[%s0 + $0x378] sm:$0xff]
  %v140 = vld [vmem:[%s0 + $0x380] sm:$0xff]
  %v141 = vld [vmem:[%s0 + $0x388] sm:$0xff]
  %v142 = vld [vmem:[%s0 + $0x390] sm:$0xff]
  %v143 = vld [vmem:[%s0 + $0x398] sm:$0xff]
  %v144 = vld [vmem:[%s0 + $0x3a0] sm:$0xff]
  %v145 = vld [vmem:[%s0 + $0x3a8] sm:$0xff]
  %v146 = vld [vmem:[%s0 + $0x3b0] sm:$0xff]
  %v147 = vld [vmem:[%s0 + $0x3b8] sm:$0xff]
  %v148 = vld [vmem:[%s0 + $0x3c0] sm:$0xff]
  %v149 = vld [vmem:[%s0 + $0x3c8] sm:$0xff]
  %v150 = vld [vmem:[%s0 + $0x3d0] sm:$0xff]
  %v151 = vld [vmem:[%s0 + $0x3d8] sm:$0xff]
  %v152 = vld [vmem:[%s0 + $0x3e0] sm:$0xff]
  %v153 = vld [vmem:[%s0 + $0x3e8] sm:$0xff]
  %v154 = vld [vmem:[%s0 + $0x3f0] sm:$0xff]
  %v155 = vld [vmem:[%s0 + $0x3f8] sm:$0xff]
  %156 = vxpose.xlu0.b32.start [1/16] %v28, 128
  %157 = vxpose.xlu0.b32.cont [2/16] %v29, 128
  %158 = vxpose.xlu0.b32.cont [3/16] %v30, 128
  %159 = vxpose.xlu0.b32.cont [4/16] %v31, 128
  %160 = vxpose.xlu0.b32.cont [5/16] %v32, 128
  %161 = vxpose.xlu0.b32.cont [6/16] %v33, 128
  %162 = vxpose.xlu0.b32.cont [7/16] %v34, 128
  %163 = vxpose.xlu0.b32.cont [8/16] %v35, 128
  %164 = vxpose.xlu0.b32.cont [9/16] %v36, 128
  %165 = vxpose.xlu0.b32.cont [10/16] %v37, 128
  %166 = vxpose.xlu0.b32.cont [11/16] %v38, 128
  %167 = vxpose.xlu0.b32.cont [12/16] %v39, 128
  %168 = vxpose.xlu0.b32.cont [13/16] %v40, 128
  %169 = vxpose.xlu0.b32.cont [14/16] %v41, 128
  %170 = vxpose.xlu0.b32.cont [15/16] %v42, 128
  %171 = vxpose.xlu0.b32.end [16/16] %v43, 128
  %v172 = vpop.trf.xlu0
  %v173 = vpop.trf.xlu0
  %v174 = vpop.trf.xlu0
  %v175 = vpop.trf.xlu0
  %v176 = vpop.trf.xlu0
  %v177 = vpop.trf.xlu0
  %v178 = vpop.trf.xlu0
  %v179 = vpop.trf.xlu0
  %v180 = vpop.trf.xlu0
  %v181 = vpop.trf.xlu0
  %v182 = vpop.trf.xlu0
  %v183 = vpop.trf.xlu0
  %v184 = vpop.trf.xlu0
  %v185 = vpop.trf.xlu0
  %v186 = vpop.trf.xlu0
  %v187 = vpop.trf.xlu0
  %188 = vxpose.xlu0.b32.start [1/16] %v44, 128
  %189 = vxpose.xlu0.b32.cont [2/16] %v45, 128
  %190 = vxpose.xlu0.b32.cont [3/16] %v46, 128
  %191 = vxpose.xlu0.b32.cont [4/16] %v47, 128
  %192 = vxpose.xlu0.b32.cont [5/16] %v48, 128
  %193 = vxpose.xlu0.b32.cont [6/16] %v49, 128
  %194 = vxpose.xlu0.b32.cont [7/16] %v50, 128
  %195 = vxpose.xlu0.b32.cont [8/16] %v51, 128
  %196 = vxpose.xlu0.b32.cont [9/16] %v52, 128
  %197 = vxpose.xlu0.b32.cont [10/16] %v53, 128
  %198 = vxpose.xlu0.b32.cont [11/16] %v54, 128
  %199 = vxpose.xlu0.b32.cont [12/16] %v55, 128
  %200 = vxpose.xlu0.b32.cont [13/16] %v56, 128
  %201 = vxpose.xlu0.b32.cont [14/16] %v57, 128
  %202 = vxpose.xlu0.b32.cont [15/16] %v58, 128
  %203 = vxpose.xlu0.b32.end [16/16] %v59, 128
  %v204 = vpop.trf.xlu0
  %v205 = vpop.trf.xlu0
  %v206 = vpop.trf.xlu0
  %v207 = vpop.trf.xlu0
  %v208 = vpop.trf.xlu0
  %v209 = vpop.trf.xlu0
  %v210 = vpop.trf.xlu0
  %v211 = vpop.trf.xlu0
  %v212 = vpop.trf.xlu0
  %v213 = vpop.trf.xlu0
  %v214 = vpop.trf.xlu0
  %v215 = vpop.trf.xlu0
  %v216 = vpop.trf.xlu0
  %v217 = vpop.trf.xlu0
  %v218 = vpop.trf.xlu0
  %v219 = vpop.trf.xlu0
  %220 = vxpose.xlu0.b32.start [1/16] %v60, 128
  %221 = vxpose.xlu0.b32.cont [2/16] %v61, 128
  %222 = vxpose.xlu0.b32.cont [3/16] %v62, 128
  %223 = vxpose.xlu0.b32.cont [4/16] %v63, 128
  %224 = vxpose.xlu0.b32.cont [5/16] %v64, 128
  %225 = vxpose.xlu0.b32.cont [6/16] %v65, 128
  %226 = vxpose.xlu0.b32.cont [7/16] %v66, 128
  %227 = vxpose.xlu0.b32.cont [8/16] %v67, 128
  %228 = vxpose.xlu0.b32.cont [9/16] %v68, 128
  %229 = vxpose.xlu0.b32.cont [10/16] %v69, 128
  %230 = vxpose.xlu0.b32.cont [11/16] %v70, 128
  %231 = vxpose.xlu0.b32.cont [12/16] %v71, 128
  %232 = vxpose.xlu0.b32.cont [13/16] %v72, 128
  %233 = vxpose.xlu0.b32.cont [14/16] %v73, 128
  %234 = vxpose.xlu0.b32.cont [15/16] %v74, 128
  %235 = vxpose.xlu0.b32.end [16/16] %v75, 128
  %v236 = vpop.trf.xlu0
  %v237 = vpop.trf.xlu0
  %v238 = vpop.trf.xlu0
  %v239 = vpop.trf.xlu0
  %v240 = vpop.trf.xlu0
  %v241 = vpop.trf.xlu0
  %v242 = vpop.trf.xlu0
  %v243 = vpop.trf.xlu0
  %v244 = vpop.trf.xlu0
  %v245 = vpop.trf.xlu0
  %v246 = vpop.trf.xlu0
  %v247 = vpop.trf.xlu0
  %v248 = vpop.trf.xlu0
  %v249 = vpop.trf.xlu0
  %v250 = vpop.trf.xlu0
  %v251 = vpop.trf.xlu0
  %252 = vxpose.xlu0.b32.start [1/16] %v76, 128
  %253 = vxpose.xlu0.b32.cont [2/16] %v77, 128
  %254 = vxpose.xlu0.b32.cont [3/16] %v78, 128
  %255 = vxpose.xlu0.b32.cont [4/16] %v79, 128
  %256 = vxpose.xlu0.b32.cont [5/16] %v80, 128
  %257 = vxpose.xlu0.b32.cont [6/16] %v81, 128
  %258 = vxpose.xlu0.b32.cont [7/16] %v82, 128
  %259 = vxpose.xlu0.b32.cont [8/16] %v83, 128
  %260 = vxpose.xlu0.b32.cont [9/16] %v84, 128
  %261 = vxpose.xlu0.b32.cont [10/16] %v85, 128
  %262 = vxpose.xlu0.b32.cont [11/16] %v86, 128
  %263 = vxpose.xlu0.b32.cont [12/16] %v87, 128
  %264 = vxpose.xlu0.b32.cont [13/16] %v88, 128
  %265 = vxpose.xlu0.b32.cont [14/16] %v89, 128
  %266 = vxpose.xlu0.b32.cont [15/16] %v90, 128
  %267 = vxpose.xlu0.b32.end [16/16] %v91, 128
  %v268 = vpop.trf.xlu0
  %v269 = vpop.trf.xlu0
  %v270 = vpop.trf.xlu0
  %v271 = vpop.trf.xlu0
  %v272 = vpop.trf.xlu0
  %v273 = vpop.trf.xlu0
  %v274 = vpop.trf.xlu0
  %v275 = vpop.trf.xlu0
  %v276 = vpop.trf.xlu0
  %v277 = vpop.trf.xlu0
  %v278 = vpop.trf.xlu0
  %v279 = vpop.trf.xlu0
  %v280 = vpop.trf.xlu0
  %v281 = vpop.trf.xlu0
  %v282 = vpop.trf.xlu0
  %v283 = vpop.trf.xlu0
  %284 = vxpose.xlu0.b32.start [1/16] %v92, 128
  %285 = vxpose.xlu0.b32.cont [2/16] %v93, 128
  %286 = vxpose.xlu0.b32.cont [3/16] %v94, 128
  %287 = vxpose.xlu0.b32.cont [4/16] %v95, 128
  %288 = vxpose.xlu0.b32.cont [5/16] %v96, 128
  %289 = vxpose.xlu0.b32.cont [6/16] %v97, 128
  %290 = vxpose.xlu0.b32.cont [7/16] %v98, 128
  %291 = vxpose.xlu0.b32.cont [8/16] %v99, 128
  %292 = vxpose.xlu0.b32.cont [9/16] %v100, 128
  %293 = vxpose.xlu0.b32.cont [10/16] %v101, 128
  %294 = vxpose.xlu0.b32.cont [11/16] %v102, 128
  %295 = vxpose.xlu0.b32.cont [12/16] %v103, 128
  %296 = vxpose.xlu0.b32.cont [13/16] %v104, 128
  %297 = vxpose.xlu0.b32.cont [14/16] %v105, 128
  %298 = vxpose.xlu0.b32.cont [15/16] %v106, 128
  %299 = vxpose.xlu0.b32.end [16/16] %v107, 128
  %v300 = vpop.trf.xlu0
  %v301 = vpop.trf.xlu0
  %v302 = vpop.trf.xlu0
  %v303 = vpop.trf.xlu0
  %v304 = vpop.trf.xlu0
  %v305 = vpop.trf.xlu0
  %v306 = vpop.trf.xlu0
  %v307 = vpop.trf.xlu0
  %v308 = vpop.trf.xlu0
  %v309 = vpop.trf.xlu0
  %v310 = vpop.trf.xlu0
  %v311 = vpop.trf.xlu0
  %v312 = vpop.trf.xlu0
  %v313 = vpop.trf.xlu0
  %v314 = vpop.trf.xlu0
  %v315 = vpop.trf.xlu0
  %316 = vxpose.xlu0.b32.start [1/16] %v108, 128
  %317 = vxpose.xlu0.b32.cont [2/16] %v109, 128
  %318 = vxpose.xlu0.b32.cont [3/16] %v110, 128
  %319 = vxpose.xlu0.b32.cont [4/16] %v111, 128
  %320 = vxpose.xlu0.b32.cont [5/16] %v112, 128
  %321 = vxpose.xlu0.b32.cont [6/16] %v113, 128
  %322 = vxpose.xlu0.b32.cont [7/16] %v114, 128
  %323 = vxpose.xlu0.b32.cont [8/16] %v115, 128
  %324 = vxpose.xlu0.b32.cont [9/16] %v116, 128
  %325 = vxpose.xlu0.b32.cont [10/16] %v117, 128
  %326 = vxpose.xlu0.b32.cont [11/16] %v118, 128
  %327 = vxpose.xlu0.b32.cont [12/16] %v119, 128
  %328 = vxpose.xlu0.b32.cont [13/16] %v120, 128
  %329 = vxpose.xlu0.b32.cont [14/16] %v121, 128
  %330 = vxpose.xlu0.b32.cont [15/16] %v122, 128
  %331 = vxpose.xlu0.b32.end [16/16] %v123, 128
  %v332 = vpop.trf.xlu0
  %v333 = vpop.trf.xlu0
  %v334 = vpop.trf.xlu0
  %v335 = vpop.trf.xlu0
  %v336 = vpop.trf.xlu0
  %v337 = vpop.trf.xlu0
  %v338 = vpop.trf.xlu0
  %v339 = vpop.trf.xlu0
  %v340 = vpop.trf.xlu0
  %v341 = vpop.trf.xlu0
  %v342 = vpop.trf.xlu0
  %v343 = vpop.trf.xlu0
  %v344 = vpop.trf.xlu0
  %v345 = vpop.trf.xlu0
  %v346 = vpop.trf.xlu0
  %v347 = vpop.trf.xlu0
  %348 = vxpose.xlu0.b32.start [1/16] %v124, 128
  %349 = vxpose.xlu0.b32.cont [2/16] %v125, 128
  %350 = vxpose.xlu0.b32.cont [3/16] %v126, 128
  %351 = vxpose.xlu0.b32.cont [4/16] %v127, 128
  %352 = vxpose.xlu0.b32.cont [5/16] %v128, 128
  %353 = vxpose.xlu0.b32.cont [6/16] %v129, 128
  %354 = vxpose.xlu0.b32.cont [7/16] %v130, 128
  %355 = vxpose.xlu0.b32.cont [8/16] %v131, 128
  %356 = vxpose.xlu0.b32.cont [9/16] %v132, 128
  %357 = vxpose.xlu0.b32.cont [10/16] %v133, 128
  %358 = vxpose.xlu0.b32.cont [11/16] %v134, 128
  %359 = vxpose.xlu0.b32.cont [12/16] %v135, 128
  %360 = vxpose.xlu0.b32.cont [13/16] %v136, 128
  %361 = vxpose.xlu0.b32.cont [14/16] %v137, 128
  %362 = vxpose.xlu0.b32.cont [15/16] %v138, 128
  %363 = vxpose.xlu0.b32.end [16/16] %v139, 128
  %v364 = vpop.trf.xlu0
  %v365 = vpop.trf.xlu0
  %v366 = vpop.trf.xlu0
  %v367 = vpop.trf.xlu0
  %v368 = vpop.trf.xlu0
  %v369 = vpop.trf.xlu0
  %v370 = vpop.trf.xlu0
  %v371 = vpop.trf.xlu0
  %v372 = vpop.trf.xlu0
  %v373 = vpop.trf.xlu0
  %v374 = vpop.trf.xlu0
  %v375 = vpop.trf.xlu0
  %v376 = vpop.trf.xlu0
  %v377 = vpop.trf.xlu0
  %v378 = vpop.trf.xlu0
  %v379 = vpop.trf.xlu0
  %380 = vxpose.xlu0.b32.start [1/16] %v140, 128
  %381 = vxpose.xlu0.b32.cont [2/16] %v141, 128
  %382 = vxpose.xlu0.b32.cont [3/16] %v142, 128
  %383 = vxpose.xlu0.b32.cont [4/16] %v143, 128
  %384 = vxpose.xlu0.b32.cont [5/16] %v144, 128
  %385 = vxpose.xlu0.b32.cont [6/16] %v145, 128
  %386 = vxpose.xlu0.b32.cont [7/16] %v146, 128
  %387 = vxpose.xlu0.b32.cont [8/16] %v147, 128
  %388 = vxpose.xlu0.b32.cont [9/16] %v148, 128
  %389 = vxpose.xlu0.b32.cont [10/16] %v149, 128
  %390 = vxpose.xlu0.b32.cont [11/16] %v150, 128
  %391 = vxpose.xlu0.b32.cont [12/16] %v151, 128
  %392 = vxpose.xlu0.b32.cont [13/16] %v152, 128
  %393 = vxpose.xlu0.b32.cont [14/16] %v153, 128
  %394 = vxpose.xlu0.b32.cont [15/16] %v154, 128
  %395 = vxpose.xlu0.b32.end [16/16] %v155, 128
  %v396 = vpop.trf.xlu0
  %v397 = vpop.trf.xlu0
  %v398 = vpop.trf.xlu0
  %v399 = vpop.trf.xlu0
  %v400 = vpop.trf.xlu0
  %v401 = vpop.trf.xlu0
  %v402 = vpop.trf.xlu0
  %v403 = vpop.trf.xlu0
  %v404 = vpop.trf.xlu0
  %v405 = vpop.trf.xlu0
  %v406 = vpop.trf.xlu0
  %v407 = vpop.trf.xlu0
  %v408 = vpop.trf.xlu0
  %v409 = vpop.trf.xlu0
  %v410 = vpop.trf.xlu0
  %v411 = vpop.trf.xlu0
  %v412 = vld [vmem:[%s1] sm:$0xff]
  %v413 = vld [vmem:[%s1 + $0x8] sm:$0xff]
  %v414 = vld [vmem:[%s1 + $0x10] sm:$0xff]
  %v415 = vld [vmem:[%s1 + $0x18] sm:$0xff]
  %v416 = vld [vmem:[%s1 + $0x20] sm:$0xff]
  %v417 = vld [vmem:[%s1 + $0x28] sm:$0xff]
  %v418 = vld [vmem:[%s1 + $0x30] sm:$0xff]
  %v419 = vld [vmem:[%s1 + $0x38] sm:$0xff]
  %v420 = vld [vmem:[%s1 + $0x40] sm:$0xff]
  %v421 = vld [vmem:[%s1 + $0x48] sm:$0xff]
  %v422 = vld [vmem:[%s1 + $0x50] sm:$0xff]
  %v423 = vld [vmem:[%s1 + $0x58] sm:$0xff]
  %v424 = vld [vmem:[%s1 + $0x60] sm:$0xff]
  %v425 = vld [vmem:[%s1 + $0x68] sm:$0xff]
  %v426 = vld [vmem:[%s1 + $0x70] sm:$0xff]
  %v427 = vld [vmem:[%s1 + $0x78] sm:$0xff]
  %429 = vset.pattern.permute.xlu0 0
  %430 = vperm.xlu0 %429, %v412
  %v431 = vpop.permute.xlu0 %430
  %434 = vset.pattern.permute.xlu0 0
  %435 = vperm.xlu0 %434, %v413
  %v436 = vpop.permute.xlu0 %435
  %439 = vset.pattern.permute.xlu0 0
  %440 = vperm.xlu0 %439, %v414
  %v441 = vpop.permute.xlu0 %440
  %444 = vset.pattern.permute.xlu0 0
  %445 = vperm.xlu0 %444, %v415
  %v446 = vpop.permute.xlu0 %445
  %449 = vset.pattern.permute.xlu0 0
  %450 = vperm.xlu0 %449, %v416
  %v451 = vpop.permute.xlu0 %450
  %454 = vset.pattern.permute.xlu0 0
  %455 = vperm.xlu0 %454, %v417
  %v456 = vpop.permute.xlu0 %455
  %459 = vset.pattern.permute.xlu0 0
  %460 = vperm.xlu0 %459, %v418
  %v461 = vpop.permute.xlu0 %460
  %464 = vset.pattern.permute.xlu0 0
  %465 = vperm.xlu0 %464, %v419
  %v466 = vpop.permute.xlu0 %465
  %469 = vset.pattern.permute.xlu0 0
  %470 = vperm.xlu0 %469, %v420
  %v471 = vpop.permute.xlu0 %470
  %474 = vset.pattern.permute.xlu0 0
  %475 = vperm.xlu0 %474, %v421
  %v476 = vpop.permute.xlu0 %475
  %479 = vset.pattern.permute.xlu0 0
  %480 = vperm.xlu0 %479, %v422
  %v481 = vpop.permute.xlu0 %480
  %484 = vset.pattern.permute.xlu0 0
  %485 = vperm.xlu0 %484, %v423
  %v486 = vpop.permute.xlu0 %485
  %489 = vset.pattern.permute.xlu0 0
  %490 = vperm.xlu0 %489, %v424
  %v491 = vpop.permute.xlu0 %490
  %494 = vset.pattern.permute.xlu0 0
  %495 = vperm.xlu0 %494, %v425
  %v496 = vpop.permute.xlu0 %495
  %499 = vset.pattern.permute.xlu0 0
  %500 = vperm.xlu0 %499, %v426
  %v501 = vpop.permute.xlu0 %500
  %504 = vset.pattern.permute.xlu0 0
  %505 = vperm.xlu0 %504, %v427
  %v506 = vpop.permute.xlu0 %505
  %v508 = vlaneseq
  %v509 = vshrl.u32 %v508, 7
  %v510 = vsub.s32 0, %v509
  %v511 = vrot.slane %v172, %v510
  %v512 = vlaneseq
  %v513 = vshrl.u32 %v512, 7
  %v514 = vsub.s32 0, %v513
  %v515 = vrot.slane %v204, %v514
  %v516 = vlaneseq
  %v517 = vshrl.u32 %v516, 7
  %v518 = vsub.s32 0, %v517
  %v519 = vrot.slane %v236, %v518
  %v520 = vlaneseq
  %v521 = vshrl.u32 %v520, 7
  %v522 = vsub.s32 0, %v521
  %v523 = vrot.slane %v268, %v522
  %v524 = vlaneseq
  %v525 = vshrl.u32 %v524, 7
  %v526 = vsub.s32 0, %v525
  %v527 = vrot.slane %v300, %v526
  %v528 = vlaneseq
  %v529 = vshrl.u32 %v528, 7
  %v530 = vsub.s32 0, %v529
  %v531 = vrot.slane %v332, %v530
  %v532 = vlaneseq
  %v533 = vshrl.u32 %v532, 7
  %v534 = vsub.s32 0, %v533
  %v535 = vrot.slane %v364, %v534
  %v536 = vlaneseq
  %v537 = vshrl.u32 %v536, 7
  %v538 = vsub.s32 0, %v537
  %v539 = vrot.slane %v396, %v538
  %v540 = vmul.f32 %v431, %v511
  %v541 = vmul.f32 %v431, %v515
  %v542 = vmul.f32 %v431, %v519
  %v543 = vmul.f32 %v431, %v523
  %v544 = vmul.f32 %v431, %v527
  %v545 = vmul.f32 %v431, %v531
  %v546 = vmul.f32 %v431, %v535
  %v547 = vmul.f32 %v431, %v539
  %v548 = vmul.f32 %v436, %v511
  %v549 = vmul.f32 %v436, %v515
  %v550 = vmul.f32 %v436, %v519
  %v551 = vmul.f32 %v436, %v523
  %v552 = vmul.f32 %v436, %v527
  %v553 = vmul.f32 %v436, %v531
  %v554 = vmul.f32 %v436, %v535
  %v555 = vmul.f32 %v436, %v539
  %v556 = vmul.f32 %v441, %v511
  %v557 = vmul.f32 %v441, %v515
  %v558 = vmul.f32 %v441, %v519
  %v559 = vmul.f32 %v441, %v523
  %v560 = vmul.f32 %v441, %v527
  %v561 = vmul.f32 %v441, %v531
  %v562 = vmul.f32 %v441, %v535
  %v563 = vmul.f32 %v441, %v539
  %v564 = vmul.f32 %v446, %v511
  %v565 = vmul.f32 %v446, %v515
  %v566 = vmul.f32 %v446, %v519
  %v567 = vmul.f32 %v446, %v523
  %v568 = vmul.f32 %v446, %v527
  %v569 = vmul.f32 %v446, %v531
  %v570 = vmul.f32 %v446, %v535
  %v571 = vmul.f32 %v446, %v539
  %v572 = vmul.f32 %v451, %v511
  %v573 = vmul.f32 %v451, %v515
  %v574 = vmul.f32 %v451, %v519
  %v575 = vmul.f32 %v451, %v523
  %v576 = vmul.f32 %v451, %v527
  %v577 = vmul.f32 %v451, %v531
  %v578 = vmul.f32 %v451, %v535
  %v579 = vmul.f32 %v451, %v539
  %v580 = vmul.f32 %v456, %v511
  %v581 = vmul.f32 %v456, %v515
  %v582 = vmul.f32 %v456, %v519
  %v583 = vmul.f32 %v456, %v523
  %v584 = vmul.f32 %v456, %v527
  %v585 = vmul.f32 %v456, %v531
  %v586 = vmul.f32 %v456, %v535
  %v587 = vmul.f32 %v456, %v539
  %v588 = vmul.f32 %v461, %v511
  %v589 = vmul.f32 %v461, %v515
  %v590 = vmul.f32 %v461, %v519
  %v591 = vmul.f32 %v461, %v523
  %v592 = vmul.f32 %v461, %v527
  %v593 = vmul.f32 %v461, %v531
  %v594 = vmul.f32 %v461, %v535
  %v595 = vmul.f32 %v461, %v539
  %v596 = vmul.f32 %v466, %v511
  %v597 = vmul.f32 %v466, %v515
  %v598 = vmul.f32 %v466, %v519
  %v599 = vmul.f32 %v466, %v523
  %v600 = vmul.f32 %v466, %v527
  %v601 = vmul.f32 %v466, %v531
  %v602 = vmul.f32 %v466, %v535
  %v603 = vmul.f32 %v466, %v539
  %v604 = vmul.f32 %v471, %v511
  %v605 = vmul.f32 %v471, %v515
  %v606 = vmul.f32 %v471, %v519
  %v607 = vmul.f32 %v471, %v523
  %v608 = vmul.f32 %v471, %v527
  %v609 = vmul.f32 %v471, %v531
  %v610 = vmul.f32 %v471, %v535
  %v611 = vmul.f32 %v471, %v539
  %v612 = vmul.f32 %v476, %v511
  %v613 = vmul.f32 %v476, %v515
  %v614 = vmul.f32 %v476, %v519
  %v615 = vmul.f32 %v476, %v523
  %v616 = vmul.f32 %v476, %v527
  %v617 = vmul.f32 %v476, %v531
  %v618 = vmul.f32 %v476, %v535
  %v619 = vmul.f32 %v476, %v539
  %v620 = vmul.f32 %v481, %v511
  %v621 = vmul.f32 %v481, %v515
  %v622 = vmul.f32 %v481, %v519
  %v623 = vmul.f32 %v481, %v523
  %v624 = vmul.f32 %v481, %v527
  %v625 = vmul.f32 %v481, %v531
  %v626 = vmul.f32 %v481, %v535
  %v627 = vmul.f32 %v481, %v539
  %v628 = vmul.f32 %v486, %v511
  %v629 = vmul.f32 %v486, %v515
  %v630 = vmul.f32 %v486, %v519
  %v631 = vmul.f32 %v486, %v523
  %v632 = vmul.f32 %v486, %v527
  %v633 = vmul.f32 %v486, %v531
  %v634 = vmul.f32 %v486, %v535
  %v635 = vmul.f32 %v486, %v539
  %v636 = vmul.f32 %v491, %v511
  %v637 = vmul.f32 %v491, %v515
  %v638 = vmul.f32 %v491, %v519
  %v639 = vmul.f32 %v491, %v523
  %v640 = vmul.f32 %v491, %v527
  %v641 = vmul.f32 %v491, %v531
  %v642 = vmul.f32 %v491, %v535
  %v643 = vmul.f32 %v491, %v539
  %v644 = vmul.f32 %v496, %v511
  %v645 = vmul.f32 %v496, %v515
  %v646 = vmul.f32 %v496, %v519
  %v647 = vmul.f32 %v496, %v523
  %v648 = vmul.f32 %v496, %v527
  %v649 = vmul.f32 %v496, %v531
  %v650 = vmul.f32 %v496, %v535
  %v651 = vmul.f32 %v496, %v539
  %v652 = vmul.f32 %v501, %v511
  %v653 = vmul.f32 %v501, %v515
  %v654 = vmul.f32 %v501, %v519
  %v655 = vmul.f32 %v501, %v523
  %v656 = vmul.f32 %v501, %v527
  %v657 = vmul.f32 %v501, %v531
  %v658 = vmul.f32 %v501, %v535
  %v659 = vmul.f32 %v501, %v539
  %v660 = vmul.f32 %v506, %v511
  %v661 = vmul.f32 %v506, %v515
  %v662 = vmul.f32 %v506, %v519
  %v663 = vmul.f32 %v506, %v523
  %v664 = vmul.f32 %v506, %v527
  %v665 = vmul.f32 %v506, %v531
  %v666 = vmul.f32 %v506, %v535
  %v667 = vmul.f32 %v506, %v539
  %668 = vset.pattern.permute.xlu0 1
  %669 = vperm.xlu0 %668, %v412
  %v670 = vpop.permute.xlu0 %669
  %672 = vset.pattern.permute.xlu0 1
  %673 = vperm.xlu0 %672, %v413
  %v674 = vpop.permute.xlu0 %673
  %676 = vset.pattern.permute.xlu0 1
  %677 = vperm.xlu0 %676, %v414
  %v678 = vpop.permute.xlu0 %677
  %680 = vset.pattern.permute.xlu0 1
  %681 = vperm.xlu0 %680, %v415
  %v682 = vpop.permute.xlu0 %681
  %684 = vset.pattern.permute.xlu0 1
  %685 = vperm.xlu0 %684, %v416
  %v686 = vpop.permute.xlu0 %685
  %688 = vset.pattern.permute.xlu0 1
  %689 = vperm.xlu0 %688, %v417
  %v690 = vpop.permute.xlu0 %689
  %692 = vset.pattern.permute.xlu0 1
  %693 = vperm.xlu0 %692, %v418
  %v694 = vpop.permute.xlu0 %693
  %696 = vset.pattern.permute.xlu0 1
  %697 = vperm.xlu0 %696, %v419
  %v698 = vpop.permute.xlu0 %697
  %700 = vset.pattern.permute.xlu0 1
  %701 = vperm.xlu0 %700, %v420
  %v702 = vpop.permute.xlu0 %701
  %704 = vset.pattern.permute.xlu0 1
  %705 = vperm.xlu0 %704, %v421
  %v706 = vpop.permute.xlu0 %705
  %708 = vset.pattern.permute.xlu0 1
  %709 = vperm.xlu0 %708, %v422
  %v710 = vpop.permute.xlu0 %709
  %712 = vset.pattern.permute.xlu0 1
  %713 = vperm.xlu0 %712, %v423
  %v714 = vpop.permute.xlu0 %713
  %716 = vset.pattern.permute.xlu0 1
  %717 = vperm.xlu0 %716, %v424
  %v718 = vpop.permute.xlu0 %717
  %720 = vset.pattern.permute.xlu0 1
  %721 = vperm.xlu0 %720, %v425
  %v722 = vpop.permute.xlu0 %721
  %724 = vset.pattern.permute.xlu0 1
  %725 = vperm.xlu0 %724, %v426
  %v726 = vpop.permute.xlu0 %725
  %728 = vset.pattern.permute.xlu0 1
  %729 = vperm.xlu0 %728, %v427
  %v730 = vpop.permute.xlu0 %729
  %v732 = vlaneseq
  %v733 = vshrl.u32 %v732, 7
  %v734 = vsub.s32 1, %v733
  %v735 = vrot.slane %v172, %v734
  %v736 = vlaneseq
  %v737 = vshrl.u32 %v736, 7
  %v738 = vsub.s32 1, %v737
  %v739 = vrot.slane %v204, %v738
  %v740 = vlaneseq
  %v741 = vshrl.u32 %v740, 7
  %v742 = vsub.s32 1, %v741
  %v743 = vrot.slane %v236, %v742
  %v744 = vlaneseq
  %v745 = vshrl.u32 %v744, 7
  %v746 = vsub.s32 1, %v745
  %v747 = vrot.slane %v268, %v746
  %v748 = vlaneseq
  %v749 = vshrl.u32 %v748, 7
  %v750 = vsub.s32 1, %v749
  %v751 = vrot.slane %v300, %v750
  %v752 = vlaneseq
  %v753 = vshrl.u32 %v752, 7
  %v754 = vsub.s32 1, %v753
  %v755 = vrot.slane %v332, %v754
  %v756 = vlaneseq
  %v757 = vshrl.u32 %v756, 7
  %v758 = vsub.s32 1, %v757
  %v759 = vrot.slane %v364, %v758
  %v760 = vlaneseq
  %v761 = vshrl.u32 %v760, 7
  %v762 = vsub.s32 1, %v761
  %v763 = vrot.slane %v396, %v762
  %v764 = vmul.f32 %v670, %v735
  %v765 = vmul.f32 %v670, %v739
  %v766 = vmul.f32 %v670, %v743
  %v767 = vmul.f32 %v670, %v747
  %v768 = vmul.f32 %v670, %v751
  %v769 = vmul.f32 %v670, %v755
  %v770 = vmul.f32 %v670, %v759
  %v771 = vmul.f32 %v670, %v763
  %v772 = vmul.f32 %v674, %v735
  %v773 = vmul.f32 %v674, %v739
  %v774 = vmul.f32 %v674, %v743
  %v775 = vmul.f32 %v674, %v747
  %v776 = vmul.f32 %v674, %v751
  %v777 = vmul.f32 %v674, %v755
  %v778 = vmul.f32 %v674, %v759
  %v779 = vmul.f32 %v674, %v763
  %v780 = vmul.f32 %v678, %v735
  %v781 = vmul.f32 %v678, %v739
  %v782 = vmul.f32 %v678, %v743
  %v783 = vmul.f32 %v678, %v747
  %v784 = vmul.f32 %v678, %v751
  %v785 = vmul.f32 %v678, %v755
  %v786 = vmul.f32 %v678, %v759
  %v787 = vmul.f32 %v678, %v763
  %v788 = vmul.f32 %v682, %v735
  %v789 = vmul.f32 %v682, %v739
  %v790 = vmul.f32 %v682, %v743
  %v791 = vmul.f32 %v682, %v747
  %v792 = vmul.f32 %v682, %v751
  %v793 = vmul.f32 %v682, %v755
  %v794 = vmul.f32 %v682, %v759
  %v795 = vmul.f32 %v682, %v763
  %v796 = vmul.f32 %v686, %v735
  %v797 = vmul.f32 %v686, %v739
  %v798 = vmul.f32 %v686, %v743
  %v799 = vmul.f32 %v686, %v747
  %v800 = vmul.f32 %v686, %v751
  %v801 = vmul.f32 %v686, %v755
  %v802 = vmul.f32 %v686, %v759
  %v803 = vmul.f32 %v686, %v763
  %v804 = vmul.f32 %v690, %v735
  %v805 = vmul.f32 %v690, %v739
  %v806 = vmul.f32 %v690, %v743
  %v807 = vmul.f32 %v690, %v747
  %v808 = vmul.f32 %v690, %v751
  %v809 = vmul.f32 %v690, %v755
  %v810 = vmul.f32 %v690, %v759
  %v811 = vmul.f32 %v690, %v763
  %v812 = vmul.f32 %v694, %v735
  %v813 = vmul.f32 %v694, %v739
  %v814 = vmul.f32 %v694, %v743
  %v815 = vmul.f32 %v694, %v747
  %v816 = vmul.f32 %v694, %v751
  %v817 = vmul.f32 %v694, %v755
  %v818 = vmul.f32 %v694, %v759
  %v819 = vmul.f32 %v694, %v763
  %v820 = vmul.f32 %v698, %v735
  %v821 = vmul.f32 %v698, %v739
  %v822 = vmul.f32 %v698, %v743
  %v823 = vmul.f32 %v698, %v747
  %v824 = vmul.f32 %v698, %v751
  %v825 = vmul.f32 %v698, %v755
  %v826 = vmul.f32 %v698, %v759
  %v827 = vmul.f32 %v698, %v763
  %v828 = vmul.f32 %v702, %v735
  %v829 = vmul.f32 %v702, %v739
  %v830 = vmul.f32 %v702, %v743
  %v831 = vmul.f32 %v702, %v747
  %v832 = vmul.f32 %v702, %v751
  %v833 = vmul.f32 %v702, %v755
  %v834 = vmul.f32 %v702, %v759
  %v835 = vmul.f32 %v702, %v763
  %v836 = vmul.f32 %v706, %v735
  %v837 = vmul.f32 %v706, %v739
  %v838 = vmul.f32 %v706, %v743
  %v839 = vmul.f32 %v706, %v747
  %v840 = vmul.f32 %v706, %v751
  %v841 = vmul.f32 %v706, %v755
  %v842 = vmul.f32 %v706, %v759
  %v843 = vmul.f32 %v706, %v763
  %v844 = vmul.f32 %v710, %v735
  %v845 = vmul.f32 %v710, %v739
  %v846 = vmul.f32 %v710, %v743
  %v847 = vmul.f32 %v710, %v747
  %v848 = vmul.f32 %v710, %v751
  %v849 = vmul.f32 %v710, %v755
  %v850 = vmul.f32 %v710, %v759
  %v851 = vmul.f32 %v710, %v763
  %v852 = vmul.f32 %v714, %v735
  %v853 = vmul.f32 %v714, %v739
  %v854 = vmul.f32 %v714, %v743
  %v855 = vmul.f32 %v714, %v747
  %v856 = vmul.f32 %v714, %v751
  %v857 = vmul.f32 %v714, %v755
  %v858 = vmul.f32 %v714, %v759
  %v859 = vmul.f32 %v714, %v763
  %v860 = vmul.f32 %v718, %v735
  %v861 = vmul.f32 %v718, %v739
  %v862 = vmul.f32 %v718, %v743
  %v863 = vmul.f32 %v718, %v747
  %v864 = vmul.f32 %v718, %v751
  %v865 = vmul.f32 %v718, %v755
  %v866 = vmul.f32 %v718, %v759
  %v867 = vmul.f32 %v718, %v763
  %v868 = vmul.f32 %v722, %v735
  %v869 = vmul.f32 %v722, %v739
  %v870 = vmul.f32 %v722, %v743
  %v871 = vmul.f32 %v722, %v747
  %v872 = vmul.f32 %v722, %v751
  %v873 = vmul.f32 %v722, %v755
  %v874 = vmul.f32 %v722, %v759
  %v875 = vmul.f32 %v722, %v763
  %v876 = vmul.f32 %v726, %v735
  %v877 = vmul.f32 %v726, %v739
  %v878 = vmul.f32 %v726, %v743
  %v879 = vmul.f32 %v726, %v747
  %v880 = vmul.f32 %v726, %v751
  %v881 = vmul.f32 %v726, %v755
  %v882 = vmul.f32 %v726, %v759
  %v883 = vmul.f32 %v726, %v763
  %v884 = vmul.f32 %v730, %v735
  %v885 = vmul.f32 %v730, %v739
  %v886 = vmul.f32 %v730, %v743
  %v887 = vmul.f32 %v730, %v747
  %v888 = vmul.f32 %v730, %v751
  %v889 = vmul.f32 %v730, %v755
  %v890 = vmul.f32 %v730, %v759
  %v891 = vmul.f32 %v730, %v763
  %v892 = vadd.f32 %v540, %v764
  %v893 = vadd.f32 %v541, %v765
  %v894 = vadd.f32 %v542, %v766
  %v895 = vadd.f32 %v543, %v767
  %v896 = vadd.f32 %v544, %v768
  %v897 = vadd.f32 %v545, %v769
  %v898 = vadd.f32 %v546, %v770
  %v899 = vadd.f32 %v547, %v771
  %v900 = vadd.f32 %v548, %v772
  %v901 = vadd.f32 %v549, %v773
  %v902 = vadd.f32 %v550, %v774
  %v903 = vadd.f32 %v551, %v775
  %v904 = vadd.f32 %v552, %v776
  %v905 = vadd.f32 %v553, %v777
  %v906 = vadd.f32 %v554, %v778
  %v907 = vadd.f32 %v555, %v779
  %v908 = vadd.f32 %v556, %v780
  %v909 = vadd.f32 %v557, %v781
  %v910 = vadd.f32 %v558, %v782
  %v911 = vadd.f32 %v559, %v783
  %v912 = vadd.f32 %v560, %v784
  %v913 = vadd.f32 %v561, %v785
  %v914 = vadd.f32 %v562, %v786
  %v915 = vadd.f32 %v563, %v787
  %v916 = vadd.f32 %v564, %v788
  %v917 = vadd.f32 %v565, %v789
  %v918 = vadd.f32 %v566, %v790
  %v919 = vadd.f32 %v567, %v791
  %v920 = vadd.f32 %v568, %v792
  %v921 = vadd.f32 %v569, %v793
  %v922 = vadd.f32 %v570, %v794
  %v923 = vadd.f32 %v571, %v795
  %v924 = vadd.f32 %v572, %v796
  %v925 = vadd.f32 %v573, %v797
  %v926 = vadd.f32 %v574, %v798
  %v927 = vadd.f32 %v575, %v799
  %v928 = vadd.f32 %v576, %v800
  %v929 = vadd.f32 %v577, %v801
  %v930 = vadd.f32 %v578, %v802
  %v931 = vadd.f32 %v579, %v803
  %v932 = vadd.f32 %v580, %v804
  %v933 = vadd.f32 %v581, %v805
  %v934 = vadd.f32 %v582, %v806
  %v935 = vadd.f32 %v583, %v807
  %v936 = vadd.f32 %v584, %v808
  %v937 = vadd.f32 %v585, %v809
  %v938 = vadd.f32 %v586, %v810
  %v939 = vadd.f32 %v587, %v811
  %v940 = vadd.f32 %v588, %v812
  %v941 = vadd.f32 %v589, %v813
  %v942 = vadd.f32 %v590, %v814
  %v943 = vadd.f32 %v591, %v815
  %v944 = vadd.f32 %v592, %v816
  %v945 = vadd.f32 %v593, %v817
  %v946 = vadd.f32 %v594, %v818
  %v947 = vadd.f32 %v595, %v819
  %v948 = vadd.f32 %v596, %v820
  %v949 = vadd.f32 %v597, %v821
  %v950 = vadd.f32 %v598, %v822
  %v951 = vadd.f32 %v599, %v823
  %v952 = vadd.f32 %v600, %v824
  %v953 = vadd.f32 %v601, %v825
  %v954 = vadd.f32 %v602, %v826
  %v955 = vadd.f32 %v603, %v827
  %v956 = vadd.f32 %v604, %v828
  %v957 = vadd.f32 %v605, %v829
  %v958 = vadd.f32 %v606, %v830
  %v959 = vadd.f32 %v607, %v831
  %v960 = vadd.f32 %v608, %v832
  %v961 = vadd.f32 %v609, %v833
  %v962 = vadd.f32 %v610, %v834
  %v963 = vadd.f32 %v611, %v835
  %v964 = vadd.f32 %v612, %v836
  %v965 = vadd.f32 %v613, %v837
  %v966 = vadd.f32 %v614, %v838
  %v967 = vadd.f32 %v615, %v839
  %v968 = vadd.f32 %v616, %v840
  %v969 = vadd.f32 %v617, %v841
  %v970 = vadd.f32 %v618, %v842
  %v971 = vadd.f32 %v619, %v843
  %v972 = vadd.f32 %v620, %v844
  %v973 = vadd.f32 %v621, %v845
  %v974 = vadd.f32 %v622, %v846
  %v975 = vadd.f32 %v623, %v847
  %v976 = vadd.f32 %v624, %v848
  %v977 = vadd.f32 %v625, %v849
  %v978 = vadd.f32 %v626, %v850
  %v979 = vadd.f32 %v627, %v851
  %v980 = vadd.f32 %v628, %v852
  %v981 = vadd.f32 %v629, %v853
  %v982 = vadd.f32 %v630, %v854
  %v983 = vadd.f32 %v631, %v855
  %v984 = vadd.f32 %v632, %v856
  %v985 = vadd.f32 %v633, %v857
  %v986 = vadd.f32 %v634, %v858
  %v987 = vadd.f32 %v635, %v859
  %v988 = vadd.f32 %v636, %v860
  %v989 = vadd.f32 %v637, %v861
  %v990 = vadd.f32 %v638, %v862
  %v991 = vadd.f32 %v639, %v863
  %v992 = vadd.f32 %v640, %v864
  %v993 = vadd.f32 %v641, %v865
  %v994 = vadd.f32 %v642, %v866
  %v995 = vadd.f32 %v643, %v867
  %v996 = vadd.f32 %v644, %v868
  %v997 = vadd.f32 %v645, %v869
  %v998 = vadd.f32 %v646, %v870
  %v999 = vadd.f32 %v647, %v871
  %v1000 = vadd.f32 %v648, %v872
  %v1001 = vadd.f32 %v649, %v873
  %v1002 = vadd.f32 %v650, %v874
  %v1003 = vadd.f32 %v651, %v875
  %v1004 = vadd.f32 %v652, %v876
  %v1005 = vadd.f32 %v653, %v877
  %v1006 = vadd.f32 %v654, %v878
  %v1007 = vadd.f32 %v655, %v879
  %v1008 = vadd.f32 %v656, %v880
  %v1009 = vadd.f32 %v657, %v881
  %v1010 = vadd.f32 %v658, %v882
  %v1011 = vadd.f32 %v659, %v883
  %v1012 = vadd.f32 %v660, %v884
  %v1013 = vadd.f32 %v661, %v885
  %v1014 = vadd.f32 %v662, %v886
  %v1015 = vadd.f32 %v663, %v887
  %v1016 = vadd.f32 %v664, %v888
  %v1017 = vadd.f32 %v665, %v889
  %v1018 = vadd.f32 %v666, %v890
  %v1019 = vadd.f32 %v667, %v891
  %v1020 = vld [vmem:[%s2] sm:$0xff]
  %v1021 = vld [vmem:[%s2 + $0x8] sm:$0xff]
  %v1022 = vld [vmem:[%s2 + $0x10] sm:$0xff]
  %v1023 = vld [vmem:[%s2 + $0x18] sm:$0xff]
  %v1024 = vld [vmem:[%s2 + $0x20] sm:$0xff]
  %v1025 = vld [vmem:[%s2 + $0x28] sm:$0xff]
  %v1026 = vld [vmem:[%s2 + $0x30] sm:$0xff]
  %v1027 = vld [vmem:[%s2 + $0x38] sm:$0xff]
  %v1028 = vld [vmem:[%s2 + $0x40] sm:$0xff]
  %v1029 = vld [vmem:[%s2 + $0x48] sm:$0xff]
  %v1030 = vld [vmem:[%s2 + $0x50] sm:$0xff]
  %v1031 = vld [vmem:[%s2 + $0x58] sm:$0xff]
  %v1032 = vld [vmem:[%s2 + $0x60] sm:$0xff]
  %v1033 = vld [vmem:[%s2 + $0x68] sm:$0xff]
  %v1034 = vld [vmem:[%s2 + $0x70] sm:$0xff]
  %v1035 = vld [vmem:[%s2 + $0x78] sm:$0xff]
  %1037 = vset.pattern.permute.xlu0 0
  %1038 = vperm.xlu0 %1037, %v1020
  %v1039 = vpop.permute.xlu0 %1038
  %1042 = vset.pattern.permute.xlu0 0
  %1043 = vperm.xlu0 %1042, %v1021
  %v1044 = vpop.permute.xlu0 %1043
  %1047 = vset.pattern.permute.xlu0 0
  %1048 = vperm.xlu0 %1047, %v1022
  %v1049 = vpop.permute.xlu0 %1048
  %1052 = vset.pattern.permute.xlu0 0
  %1053 = vperm.xlu0 %1052, %v1023
  %v1054 = vpop.permute.xlu0 %1053
  %1057 = vset.pattern.permute.xlu0 0
  %1058 = vperm.xlu0 %1057, %v1024
  %v1059 = vpop.permute.xlu0 %1058
  %1062 = vset.pattern.permute.xlu0 0
  %1063 = vperm.xlu0 %1062, %v1025
  %v1064 = vpop.permute.xlu0 %1063
  %1067 = vset.pattern.permute.xlu0 0
  %1068 = vperm.xlu0 %1067, %v1026
  %v1069 = vpop.permute.xlu0 %1068
  %1072 = vset.pattern.permute.xlu0 0
  %1073 = vperm.xlu0 %1072, %v1027
  %v1074 = vpop.permute.xlu0 %1073
  %1077 = vset.pattern.permute.xlu0 0
  %1078 = vperm.xlu0 %1077, %v1028
  %v1079 = vpop.permute.xlu0 %1078
  %1082 = vset.pattern.permute.xlu0 0
  %1083 = vperm.xlu0 %1082, %v1029
  %v1084 = vpop.permute.xlu0 %1083
  %1087 = vset.pattern.permute.xlu0 0
  %1088 = vperm.xlu0 %1087, %v1030
  %v1089 = vpop.permute.xlu0 %1088
  %1092 = vset.pattern.permute.xlu0 0
  %1093 = vperm.xlu0 %1092, %v1031
  %v1094 = vpop.permute.xlu0 %1093
  %1097 = vset.pattern.permute.xlu0 0
  %1098 = vperm.xlu0 %1097, %v1032
  %v1099 = vpop.permute.xlu0 %1098
  %1102 = vset.pattern.permute.xlu0 0
  %1103 = vperm.xlu0 %1102, %v1033
  %v1104 = vpop.permute.xlu0 %1103
  %1107 = vset.pattern.permute.xlu0 0
  %1108 = vperm.xlu0 %1107, %v1034
  %v1109 = vpop.permute.xlu0 %1108
  %1112 = vset.pattern.permute.xlu0 0
  %1113 = vperm.xlu0 %1112, %v1035
  %v1114 = vpop.permute.xlu0 %1113
  %v1116 = vadd.f32 %v892, %v1039
  %v1117 = vadd.f32 %v893, %v1039
  %v1118 = vadd.f32 %v894, %v1039
  %v1119 = vadd.f32 %v895, %v1039
  %v1120 = vadd.f32 %v896, %v1039
  %v1121 = vadd.f32 %v897, %v1039
  %v1122 = vadd.f32 %v898, %v1039
  %v1123 = vadd.f32 %v899, %v1039
  %v1124 = vadd.f32 %v900, %v1044
  %v1125 = vadd.f32 %v901, %v1044
  %v1126 = vadd.f32 %v902, %v1044
  %v1127 = vadd.f32 %v903, %v1044
  %v1128 = vadd.f32 %v904, %v1044
  %v1129 = vadd.f32 %v905, %v1044
  %v1130 = vadd.f32 %v906, %v1044
  %v1131 = vadd.f32 %v907, %v1044
  %v1132 = vadd.f32 %v908, %v1049
  %v1133 = vadd.f32 %v909, %v1049
  %v1134 = vadd.f32 %v910, %v1049
  %v1135 = vadd.f32 %v911, %v1049
  %v1136 = vadd.f32 %v912, %v1049
  %v1137 = vadd.f32 %v913, %v1049
  %v1138 = vadd.f32 %v914, %v1049
  %v1139 = vadd.f32 %v915, %v1049
  %v1140 = vadd.f32 %v916, %v1054
  %v1141 = vadd.f32 %v917, %v1054
  %v1142 = vadd.f32 %v918, %v1054
  %v1143 = vadd.f32 %v919, %v1054
  %v1144 = vadd.f32 %v920, %v1054
  %v1145 = vadd.f32 %v921, %v1054
  %v1146 = vadd.f32 %v922, %v1054
  %v1147 = vadd.f32 %v923, %v1054
  %v1148 = vadd.f32 %v924, %v1059
  %v1149 = vadd.f32 %v925, %v1059
  %v1150 = vadd.f32 %v926, %v1059
  %v1151 = vadd.f32 %v927, %v1059
  %v1152 = vadd.f32 %v928, %v1059
  %v1153 = vadd.f32 %v929, %v1059
  %v1154 = vadd.f32 %v930, %v1059
  %v1155 = vadd.f32 %v931, %v1059
  %v1156 = vadd.f32 %v932, %v1064
  %v1157 = vadd.f32 %v933, %v1064
  %v1158 = vadd.f32 %v934, %v1064
  %v1159 = vadd.f32 %v935, %v1064
  %v1160 = vadd.f32 %v936, %v1064
  %v1161 = vadd.f32 %v937, %v1064
  %v1162 = vadd.f32 %v938, %v1064
  %v1163 = vadd.f32 %v939, %v1064
  %v1164 = vadd.f32 %v940, %v1069
  %v1165 = vadd.f32 %v941, %v1069
  %v1166 = vadd.f32 %v942, %v1069
  %v1167 = vadd.f32 %v943, %v1069
  %v1168 = vadd.f32 %v944, %v1069
  %v1169 = vadd.f32 %v945, %v1069
  %v1170 = vadd.f32 %v946, %v1069
  %v1171 = vadd.f32 %v947, %v1069
  %v1172 = vadd.f32 %v948, %v1074
  %v1173 = vadd.f32 %v949, %v1074
  %v1174 = vadd.f32 %v950, %v1074
  %v1175 = vadd.f32 %v951, %v1074
  %v1176 = vadd.f32 %v952, %v1074
  %v1177 = vadd.f32 %v953, %v1074
  %v1178 = vadd.f32 %v954, %v1074
  %v1179 = vadd.f32 %v955, %v1074
  %v1180 = vadd.f32 %v956, %v1079
  %v1181 = vadd.f32 %v957, %v1079
  %v1182 = vadd.f32 %v958, %v1079
  %v1183 = vadd.f32 %v959, %v1079
  %v1184 = vadd.f32 %v960, %v1079
  %v1185 = vadd.f32 %v961, %v1079
  %v1186 = vadd.f32 %v962, %v1079
  %v1187 = vadd.f32 %v963, %v1079
  %v1188 = vadd.f32 %v964, %v1084
  %v1189 = vadd.f32 %v965, %v1084
  %v1190 = vadd.f32 %v966, %v1084
  %v1191 = vadd.f32 %v967, %v1084
  %v1192 = vadd.f32 %v968, %v1084
  %v1193 = vadd.f32 %v969, %v1084
  %v1194 = vadd.f32 %v970, %v1084
  %v1195 = vadd.f32 %v971, %v1084
  %v1196 = vadd.f32 %v972, %v1089
  %v1197 = vadd.f32 %v973, %v1089
  %v1198 = vadd.f32 %v974, %v1089
  %v1199 = vadd.f32 %v975, %v1089
  %v1200 = vadd.f32 %v976, %v1089
  %v1201 = vadd.f32 %v977, %v1089
  %v1202 = vadd.f32 %v978, %v1089
  %v1203 = vadd.f32 %v979, %v1089
  %v1204 = vadd.f32 %v980, %v1094
  %v1205 = vadd.f32 %v981, %v1094
  %v1206 = vadd.f32 %v982, %v1094
  %v1207 = vadd.f32 %v983, %v1094
  %v1208 = vadd.f32 %v984, %v1094
  %v1209 = vadd.f32 %v985, %v1094
  %v1210 = vadd.f32 %v986, %v1094
  %v1211 = vadd.f32 %v987, %v1094
  %v1212 = vadd.f32 %v988, %v1099
  %v1213 = vadd.f32 %v989, %v1099
  %v1214 = vadd.f32 %v990, %v1099
  %v1215 = vadd.f32 %v991, %v1099
  %v1216 = vadd.f32 %v992, %v1099
  %v1217 = vadd.f32 %v993, %v1099
  %v1218 = vadd.f32 %v994, %v1099
  %v1219 = vadd.f32 %v995, %v1099
  %v1220 = vadd.f32 %v996, %v1104
  %v1221 = vadd.f32 %v997, %v1104
  %v1222 = vadd.f32 %v998, %v1104
  %v1223 = vadd.f32 %v999, %v1104
  %v1224 = vadd.f32 %v1000, %v1104
  %v1225 = vadd.f32 %v1001, %v1104
  %v1226 = vadd.f32 %v1002, %v1104
  %v1227 = vadd.f32 %v1003, %v1104
  %v1228 = vadd.f32 %v1004, %v1109
  %v1229 = vadd.f32 %v1005, %v1109
  %v1230 = vadd.f32 %v1006, %v1109
  %v1231 = vadd.f32 %v1007, %v1109
  %v1232 = vadd.f32 %v1008, %v1109
  %v1233 = vadd.f32 %v1009, %v1109
  %v1234 = vadd.f32 %v1010, %v1109
  %v1235 = vadd.f32 %v1011, %v1109
  %v1236 = vadd.f32 %v1012, %v1114
  %v1237 = vadd.f32 %v1013, %v1114
  %v1238 = vadd.f32 %v1014, %v1114
  %v1239 = vadd.f32 %v1015, %v1114
  %v1240 = vadd.f32 %v1016, %v1114
  %v1241 = vadd.f32 %v1017, %v1114
  %v1242 = vadd.f32 %v1018, %v1114
  %v1243 = vadd.f32 %v1019, %v1114
  %v1244 = vmax.f32 %v1116, 0.0
  %v1245 = vmax.f32 %v1117, 0.0
  %v1246 = vmax.f32 %v1118, 0.0
  %v1247 = vmax.f32 %v1119, 0.0
  %v1248 = vmax.f32 %v1120, 0.0
  %v1249 = vmax.f32 %v1121, 0.0
  %v1250 = vmax.f32 %v1122, 0.0
  %v1251 = vmax.f32 %v1123, 0.0
  %v1252 = vmax.f32 %v1124, 0.0
  %v1253 = vmax.f32 %v1125, 0.0
  %v1254 = vmax.f32 %v1126, 0.0
  %v1255 = vmax.f32 %v1127, 0.0
  %v1256 = vmax.f32 %v1128, 0.0
  %v1257 = vmax.f32 %v1129, 0.0
  %v1258 = vmax.f32 %v1130, 0.0
  %v1259 = vmax.f32 %v1131, 0.0
  %v1260 = vmax.f32 %v1132, 0.0
  %v1261 = vmax.f32 %v1133, 0.0
  %v1262 = vmax.f32 %v1134, 0.0
  %v1263 = vmax.f32 %v1135, 0.0
  %v1264 = vmax.f32 %v1136, 0.0
  %v1265 = vmax.f32 %v1137, 0.0
  %v1266 = vmax.f32 %v1138, 0.0
  %v1267 = vmax.f32 %v1139, 0.0
  %v1268 = vmax.f32 %v1140, 0.0
  %v1269 = vmax.f32 %v1141, 0.0
  %v1270 = vmax.f32 %v1142, 0.0
  %v1271 = vmax.f32 %v1143, 0.0
  %v1272 = vmax.f32 %v1144, 0.0
  %v1273 = vmax.f32 %v1145, 0.0
  %v1274 = vmax.f32 %v1146, 0.0
  %v1275 = vmax.f32 %v1147, 0.0
  %v1276 = vmax.f32 %v1148, 0.0
  %v1277 = vmax.f32 %v1149, 0.0
  %v1278 = vmax.f32 %v1150, 0.0
  %v1279 = vmax.f32 %v1151, 0.0
  %v1280 = vmax.f32 %v1152, 0.0
  %v1281 = vmax.f32 %v1153, 0.0
  %v1282 = vmax.f32 %v1154, 0.0
  %v1283 = vmax.f32 %v1155, 0.0
  %v1284 = vmax.f32 %v1156, 0.0
  %v1285 = vmax.f32 %v1157, 0.0
  %v1286 = vmax.f32 %v1158, 0.0
  %v1287 = vmax.f32 %v1159, 0.0
  %v1288 = vmax.f32 %v1160, 0.0
  %v1289 = vmax.f32 %v1161, 0.0
  %v1290 = vmax.f32 %v1162, 0.0
  %v1291 = vmax.f32 %v1163, 0.0
  %v1292 = vmax.f32 %v1164, 0.0
  %v1293 = vmax.f32 %v1165, 0.0
  %v1294 = vmax.f32 %v1166, 0.0
  %v1295 = vmax.f32 %v1167, 0.0
  %v1296 = vmax.f32 %v1168, 0.0
  %v1297 = vmax.f32 %v1169, 0.0
  %v1298 = vmax.f32 %v1170, 0.0
  %v1299 = vmax.f32 %v1171, 0.0
  %v1300 = vmax.f32 %v1172, 0.0
  %v1301 = vmax.f32 %v1173, 0.0
  %v1302 = vmax.f32 %v1174, 0.0
  %v1303 = vmax.f32 %v1175, 0.0
  %v1304 = vmax.f32 %v1176, 0.0
  %v1305 = vmax.f32 %v1177, 0.0
  %v1306 = vmax.f32 %v1178, 0.0
  %v1307 = vmax.f32 %v1179, 0.0
  %v1308 = vmax.f32 %v1180, 0.0
  %v1309 = vmax.f32 %v1181, 0.0
  %v1310 = vmax.f32 %v1182, 0.0
  %v1311 = vmax.f32 %v1183, 0.0
  %v1312 = vmax.f32 %v1184, 0.0
  %v1313 = vmax.f32 %v1185, 0.0
  %v1314 = vmax.f32 %v1186, 0.0
  %v1315 = vmax.f32 %v1187, 0.0
  %v1316 = vmax.f32 %v1188, 0.0
  %v1317 = vmax.f32 %v1189, 0.0
  %v1318 = vmax.f32 %v1190, 0.0
  %v1319 = vmax.f32 %v1191, 0.0
  %v1320 = vmax.f32 %v1192, 0.0
  %v1321 = vmax.f32 %v1193, 0.0
  %v1322 = vmax.f32 %v1194, 0.0
  %v1323 = vmax.f32 %v1195, 0.0
  %v1324 = vmax.f32 %v1196, 0.0
  %v1325 = vmax.f32 %v1197, 0.0
  %v1326 = vmax.f32 %v1198, 0.0
  %v1327 = vmax.f32 %v1199, 0.0
  %v1328 = vmax.f32 %v1200, 0.0
  %v1329 = vmax.f32 %v1201, 0.0
  %v1330 = vmax.f32 %v1202, 0.0
  %v1331 = vmax.f32 %v1203, 0.0
  %v1332 = vmax.f32 %v1204, 0.0
  %v1333 = vmax.f32 %v1205, 0.0
  %v1334 = vmax.f32 %v1206, 0.0
  %v1335 = vmax.f32 %v1207, 0.0
  %v1336 = vmax.f32 %v1208, 0.0
  %v1337 = vmax.f32 %v1209, 0.0
  %v1338 = vmax.f32 %v1210, 0.0
  %v1339 = vmax.f32 %v1211, 0.0
  %v1340 = vmax.f32 %v1212, 0.0
  %v1341 = vmax.f32 %v1213, 0.0
  %v1342 = vmax.f32 %v1214, 0.0
  %v1343 = vmax.f32 %v1215, 0.0
  %v1344 = vmax.f32 %v1216, 0.0
  %v1345 = vmax.f32 %v1217, 0.0
  %v1346 = vmax.f32 %v1218, 0.0
  %v1347 = vmax.f32 %v1219, 0.0
  %v1348 = vmax.f32 %v1220, 0.0
  %v1349 = vmax.f32 %v1221, 0.0
  %v1350 = vmax.f32 %v1222, 0.0
  %v1351 = vmax.f32 %v1223, 0.0
  %v1352 = vmax.f32 %v1224, 0.0
  %v1353 = vmax.f32 %v1225, 0.0
  %v1354 = vmax.f32 %v1226, 0.0
  %v1355 = vmax.f32 %v1227, 0.0
  %v1356 = vmax.f32 %v1228, 0.0
  %v1357 = vmax.f32 %v1229, 0.0
  %v1358 = vmax.f32 %v1230, 0.0
  %v1359 = vmax.f32 %v1231, 0.0
  %v1360 = vmax.f32 %v1232, 0.0
  %v1361 = vmax.f32 %v1233, 0.0
  %v1362 = vmax.f32 %v1234, 0.0
  %v1363 = vmax.f32 %v1235, 0.0
  %v1364 = vmax.f32 %v1236, 0.0
  %v1365 = vmax.f32 %v1237, 0.0
  %v1366 = vmax.f32 %v1238, 0.0
  %v1367 = vmax.f32 %v1239, 0.0
  %v1368 = vmax.f32 %v1240, 0.0
  %v1369 = vmax.f32 %v1241, 0.0
  %v1370 = vmax.f32 %v1242, 0.0
  %v1371 = vmax.f32 %v1243, 0.0
  %v1372 = vpack.c.bf16 %v1252, %v1244
  %v1373 = vpack.c.bf16 %v1253, %v1245
  %v1374 = vpack.c.bf16 %v1254, %v1246
  %v1375 = vpack.c.bf16 %v1255, %v1247
  %v1376 = vpack.c.bf16 %v1256, %v1248
  %v1377 = vpack.c.bf16 %v1257, %v1249
  %v1378 = vpack.c.bf16 %v1258, %v1250
  %v1379 = vpack.c.bf16 %v1259, %v1251
  %v1380 = vpack.c.bf16 %v1268, %v1260
  %v1381 = vpack.c.bf16 %v1269, %v1261
  %v1382 = vpack.c.bf16 %v1270, %v1262
  %v1383 = vpack.c.bf16 %v1271, %v1263
  %v1384 = vpack.c.bf16 %v1272, %v1264
  %v1385 = vpack.c.bf16 %v1273, %v1265
  %v1386 = vpack.c.bf16 %v1274, %v1266
  %v1387 = vpack.c.bf16 %v1275, %v1267
  %v1388 = vpack.c.bf16 %v1284, %v1276
  %v1389 = vpack.c.bf16 %v1285, %v1277
  %v1390 = vpack.c.bf16 %v1286, %v1278
  %v1391 = vpack.c.bf16 %v1287, %v1279
  %v1392 = vpack.c.bf16 %v1288, %v1280
  %v1393 = vpack.c.bf16 %v1289, %v1281
  %v1394 = vpack.c.bf16 %v1290, %v1282
  %v1395 = vpack.c.bf16 %v1291, %v1283
  %v1396 = vpack.c.bf16 %v1300, %v1292
  %v1397 = vpack.c.bf16 %v1301, %v1293
  %v1398 = vpack.c.bf16 %v1302, %v1294
  %v1399 = vpack.c.bf16 %v1303, %v1295
  %v1400 = vpack.c.bf16 %v1304, %v1296
  %v1401 = vpack.c.bf16 %v1305, %v1297
  %v1402 = vpack.c.bf16 %v1306, %v1298
  %v1403 = vpack.c.bf16 %v1307, %v1299
  %v1404 = vpack.c.bf16 %v1316, %v1308
  %v1405 = vpack.c.bf16 %v1317, %v1309
  %v1406 = vpack.c.bf16 %v1318, %v1310
  %v1407 = vpack.c.bf16 %v1319, %v1311
  %v1408 = vpack.c.bf16 %v1320, %v1312
  %v1409 = vpack.c.bf16 %v1321, %v1313
  %v1410 = vpack.c.bf16 %v1322, %v1314
  %v1411 = vpack.c.bf16 %v1323, %v1315
  %v1412 = vpack.c.bf16 %v1332, %v1324
  %v1413 = vpack.c.bf16 %v1333, %v1325
  %v1414 = vpack.c.bf16 %v1334, %v1326
  %v1415 = vpack.c.bf16 %v1335, %v1327
  %v1416 = vpack.c.bf16 %v1336, %v1328
  %v1417 = vpack.c.bf16 %v1337, %v1329
  %v1418 = vpack.c.bf16 %v1338, %v1330
  %v1419 = vpack.c.bf16 %v1339, %v1331
  %v1420 = vpack.c.bf16 %v1348, %v1340
  %v1421 = vpack.c.bf16 %v1349, %v1341
  %v1422 = vpack.c.bf16 %v1350, %v1342
  %v1423 = vpack.c.bf16 %v1351, %v1343
  %v1424 = vpack.c.bf16 %v1352, %v1344
  %v1425 = vpack.c.bf16 %v1353, %v1345
  %v1426 = vpack.c.bf16 %v1354, %v1346
  %v1427 = vpack.c.bf16 %v1355, %v1347
  %v1428 = vpack.c.bf16 %v1364, %v1356
  %v1429 = vpack.c.bf16 %v1365, %v1357
  %v1430 = vpack.c.bf16 %v1366, %v1358
  %v1431 = vpack.c.bf16 %v1367, %v1359
  %v1432 = vpack.c.bf16 %v1368, %v1360
  %v1433 = vpack.c.bf16 %v1369, %v1361
  %v1434 = vpack.c.bf16 %v1370, %v1362
  %v1435 = vpack.c.bf16 %v1371, %v1363
  %v1436 = vld [vmem:[%s3] sm:$0xf]
  %v1437 = vld [vmem:[%s3 + $0x4] sm:$0xf]
  %v1438 = vld [vmem:[%s3 + $0x8] sm:$0xf]
  %v1439 = vld [vmem:[%s3 + $0xc] sm:$0xf]
  %v1440 = vld [vmem:[%s3 + $0x10] sm:$0xf]
  %v1441 = vld [vmem:[%s3 + $0x14] sm:$0xf]
  %v1442 = vld [vmem:[%s3 + $0x18] sm:$0xf]
  %v1443 = vld [vmem:[%s3 + $0x1c] sm:$0xf]
  %v1444 = vld [vmem:[%s3 + $0x20] sm:$0xf]
  %v1445 = vld [vmem:[%s3 + $0x24] sm:$0xf]
  %v1446 = vld [vmem:[%s3 + $0x28] sm:$0xf]
  %v1447 = vld [vmem:[%s3 + $0x2c] sm:$0xf]
  %v1448 = vld [vmem:[%s3 + $0x30] sm:$0xf]
  %v1449 = vld [vmem:[%s3 + $0x34] sm:$0xf]
  %v1450 = vld [vmem:[%s3 + $0x38] sm:$0xf]
  %v1451 = vld [vmem:[%s3 + $0x3c] sm:$0xf]
  %v1452 = vld [vmem:[%s4] sm:$0xff]
  %v1453 = vld [vmem:[%s4 + $0x8] sm:$0xff]
  %v1454 = vld [vmem:[%s4 + $0x10] sm:$0xff]
  %v1455 = vld [vmem:[%s4 + $0x18] sm:$0xff]
  %v1456 = vld [vmem:[%s4 + $0x20] sm:$0xff]
  %v1457 = vld [vmem:[%s4 + $0x28] sm:$0xff]
  %v1458 = vld [vmem:[%s4 + $0x30] sm:$0xff]
  %v1459 = vld [vmem:[%s4 + $0x38] sm:$0xff]
  %v1460 = vld [vmem:[%s4 + $0x40] sm:$0xff]
  %v1461 = vld [vmem:[%s4 + $0x48] sm:$0xff]
  %v1462 = vld [vmem:[%s4 + $0x50] sm:$0xff]
  %v1463 = vld [vmem:[%s4 + $0x58] sm:$0xff]
  %v1464 = vld [vmem:[%s4 + $0x60] sm:$0xff]
  %v1465 = vld [vmem:[%s4 + $0x68] sm:$0xff]
  %v1466 = vld [vmem:[%s4 + $0x70] sm:$0xff]
  %v1467 = vld [vmem:[%s4 + $0x78] sm:$0xff]
  %1469 = vset.pattern.permute.xlu0 0
  %1470 = vperm.xlu0 %1469, %v1452
  %v1471 = vpop.permute.xlu0 %1470
  %1474 = vset.pattern.permute.xlu0 0
  %1475 = vperm.xlu0 %1474, %v1453
  %v1476 = vpop.permute.xlu0 %1475
  %1479 = vset.pattern.permute.xlu0 0
  %1480 = vperm.xlu0 %1479, %v1454
  %v1481 = vpop.permute.xlu0 %1480
  %1484 = vset.pattern.permute.xlu0 0
  %1485 = vperm.xlu0 %1484, %v1455
  %v1486 = vpop.permute.xlu0 %1485
  %1489 = vset.pattern.permute.xlu0 0
  %1490 = vperm.xlu0 %1489, %v1456
  %v1491 = vpop.permute.xlu0 %1490
  %1494 = vset.pattern.permute.xlu0 0
  %1495 = vperm.xlu0 %1494, %v1457
  %v1496 = vpop.permute.xlu0 %1495
  %1499 = vset.pattern.permute.xlu0 0
  %1500 = vperm.xlu0 %1499, %v1458
  %v1501 = vpop.permute.xlu0 %1500
  %1504 = vset.pattern.permute.xlu0 0
  %1505 = vperm.xlu0 %1504, %v1459
  %v1506 = vpop.permute.xlu0 %1505
  %1509 = vset.pattern.permute.xlu0 0
  %1510 = vperm.xlu0 %1509, %v1460
  %v1511 = vpop.permute.xlu0 %1510
  %1514 = vset.pattern.permute.xlu0 0
  %1515 = vperm.xlu0 %1514, %v1461
  %v1516 = vpop.permute.xlu0 %1515
  %1519 = vset.pattern.permute.xlu0 0
  %1520 = vperm.xlu0 %1519, %v1462
  %v1521 = vpop.permute.xlu0 %1520
  %1524 = vset.pattern.permute.xlu0 0
  %1525 = vperm.xlu0 %1524, %v1463
  %v1526 = vpop.permute.xlu0 %1525
  %1529 = vset.pattern.permute.xlu0 0
  %1530 = vperm.xlu0 %1529, %v1464
  %v1531 = vpop.permute.xlu0 %1530
  %1534 = vset.pattern.permute.xlu0 0
  %1535 = vperm.xlu0 %1534, %v1465
  %v1536 = vpop.permute.xlu0 %1535
  %1539 = vset.pattern.permute.xlu0 0
  %1540 = vperm.xlu0 %1539, %v1466
  %v1541 = vpop.permute.xlu0 %1540
  %1544 = vset.pattern.permute.xlu0 0
  %1545 = vperm.xlu0 %1544, %v1467
  %v1546 = vpop.permute.xlu0 %1545
  %v1564 = vunpack.c.l.b16 %v1436
  %v1565 = vunpack.c.l.b16 %v1437
  %v1566 = vunpack.c.l.b16 %v1438
  %v1567 = vunpack.c.l.b16 %v1439
  %v1568 = vunpack.c.l.b16 %v1440
  %v1569 = vunpack.c.l.b16 %v1441
  %v1570 = vunpack.c.l.b16 %v1442
  %v1571 = vunpack.c.l.b16 %v1443
  %v1572 = vunpack.c.l.b16 %v1444
  %v1573 = vunpack.c.l.b16 %v1445
  %v1574 = vunpack.c.l.b16 %v1446
  %v1575 = vunpack.c.l.b16 %v1447
  %v1576 = vunpack.c.l.b16 %v1448
  %v1577 = vunpack.c.l.b16 %v1449
  %v1578 = vunpack.c.l.b16 %v1450
  %v1579 = vunpack.c.l.b16 %v1451
  %v1580 = vpack.c.b16 %v1565, %v1564
  %v1581 = vpack.c.b16 %v1567, %v1566
  %v1582 = vpack.c.b16 %v1569, %v1568
  %v1583 = vpack.c.b16 %v1571, %v1570
  %v1584 = vpack.c.b16 %v1573, %v1572
  %v1585 = vpack.c.b16 %v1575, %v1574
  %v1586 = vpack.c.b16 %v1577, %v1576
  %v1587 = vpack.c.b16 %v1579, %v1578
  %1596 = vmatprep.subr.bf16.mxu0 %v1429
  %1597 = vmatpush1.bf16.msra.mxu0 %v1428
  %1598 = vmatprep.subr.bf16.mxu0 %v1421
  %1599 = vmatpush1.bf16.msra.mxu0 %v1420
  %1600 = vmatprep.subr.bf16.mxu0 %v1413
  %1601 = vmatpush1.bf16.msra.mxu0 %v1412
  %1602 = vmatprep.subr.bf16.mxu0 %v1405
  %1603 = vmatpush1.bf16.msra.mxu0 %v1404
  %1604 = vmatprep.subr.bf16.mxu0 %v1397
  %1605 = vmatpush1.bf16.msra.mxu0 %v1396
  %1606 = vmatprep.subr.bf16.mxu0 %v1389
  %1607 = vmatpush1.bf16.msra.mxu0 %v1388
  %1608 = vmatprep.subr.bf16.mxu0 %v1381
  %1609 = vmatpush1.bf16.msra.mxu0 %v1380
  %1610 = vmatprep.subr.bf16.mxu0 %v1373
  %1611 = vmatpush1.bf16.msra.mxu0 %v1372
  %1612 = vmatprep.subr.bf16.mxu0 0
  %1613 = vmatpush2.bf16.msra.mxu0 0
  %1614 = vmatprep.subr.bf16.mxu0 0
  %1615 = vmatpush2.bf16.msra.mxu0 0
  %1616 = vmatprep.subr.bf16.mxu0 0
  %1617 = vmatpush2.bf16.msra.mxu0 0
  %1618 = vmatprep.subr.bf16.mxu0 0
  %1619 = vmatpush2.bf16.msra.mxu0 0
  %1620 = vmatprep.subr.bf16.mxu0 0
  %1621 = vmatpush2.bf16.msra.mxu0 0
  %1622 = vmatprep.subr.bf16.mxu0 0
  %1623 = vmatpush2.bf16.msra.mxu0 0
  %1624 = vmatprep.subr.bf16.mxu0 0
  %1625 = vmatpush2.bf16.msra.mxu0 0
  %1626 = vmatprep.subr.bf16.mxu0 0
  %1627 = vmatpush2.bf16.msra.mxu0 0
  %1628 = vmatprep.mubr.bf16.mxu0 0
  %1629 = vmatmul.mubr.bf16.gmra.mxu0 %v1580
  %v1630 = vpop.f32.mrf.mxu0
  %v1631 = vadd.f32 %v1471, %v1630
  %v1632 = vpop.f32.mrf.mxu0
  %v1633 = vadd.f32 %v1471, %v1632
  %v1634 = vpop.f32.mrf.mxu0
  %v1635 = vadd.f32 %v1476, %v1634
  %v1636 = vpop.f32.mrf.mxu0
  %v1637 = vadd.f32 %v1476, %v1636
  %1638 = vmatprep.mubr.bf16.mxu0 0
  %1639 = vmatmul.mubr.bf16.gmra.mxu0 %v1581
  %v1640 = vpop.f32.mrf.mxu0
  %v1641 = vadd.f32 %v1481, %v1640
  %v1642 = vpop.f32.mrf.mxu0
  %v1643 = vadd.f32 %v1481, %v1642
  %v1644 = vpop.f32.mrf.mxu0
  %v1645 = vadd.f32 %v1486, %v1644
  %v1646 = vpop.f32.mrf.mxu0
  %v1647 = vadd.f32 %v1486, %v1646
  %1648 = vmatprep.mubr.bf16.mxu0 0
  %1649 = vmatmul.mubr.bf16.gmra.mxu0 %v1582
  %v1650 = vpop.f32.mrf.mxu0
  %v1651 = vadd.f32 %v1491, %v1650
  %v1652 = vpop.f32.mrf.mxu0
  %v1653 = vadd.f32 %v1491, %v1652
  %v1654 = vpop.f32.mrf.mxu0
  %v1655 = vadd.f32 %v1496, %v1654
  %v1656 = vpop.f32.mrf.mxu0
  %v1657 = vadd.f32 %v1496, %v1656
  %1658 = vmatprep.mubr.bf16.mxu0 0
  %1659 = vmatmul.mubr.bf16.gmra.mxu0 %v1583
  %v1660 = vpop.f32.mrf.mxu0
  %v1661 = vadd.f32 %v1501, %v1660
  %v1662 = vpop.f32.mrf.mxu0
  %v1663 = vadd.f32 %v1501, %v1662
  %v1664 = vpop.f32.mrf.mxu0
  %v1665 = vadd.f32 %v1506, %v1664
  %v1666 = vpop.f32.mrf.mxu0
  %v1667 = vadd.f32 %v1506, %v1666
  %1668 = vmatprep.mubr.bf16.mxu0 0
  %1669 = vmatmul.mubr.bf16.gmra.mxu0 %v1584
  %v1670 = vpop.f32.mrf.mxu0
  %v1671 = vadd.f32 %v1511, %v1670
  %v1672 = vpop.f32.mrf.mxu0
  %v1673 = vadd.f32 %v1511, %v1672
  %v1674 = vpop.f32.mrf.mxu0
  %v1675 = vadd.f32 %v1516, %v1674
  %v1676 = vpop.f32.mrf.mxu0
  %v1677 = vadd.f32 %v1516, %v1676
  %1678 = vmatprep.mubr.bf16.mxu0 0
  %1679 = vmatmul.mubr.bf16.gmra.mxu0 %v1585
  %v1680 = vpop.f32.mrf.mxu0
  %v1681 = vadd.f32 %v1521, %v1680
  %v1682 = vpop.f32.mrf.mxu0
  %v1683 = vadd.f32 %v1521, %v1682
  %v1684 = vpop.f32.mrf.mxu0
  %v1685 = vadd.f32 %v1526, %v1684
  %v1686 = vpop.f32.mrf.mxu0
  %v1687 = vadd.f32 %v1526, %v1686
  %1688 = vmatprep.mubr.bf16.mxu0 0
  %1689 = vmatmul.mubr.bf16.gmra.mxu0 %v1586
  %v1690 = vpop.f32.mrf.mxu0
  %v1691 = vadd.f32 %v1531, %v1690
  %v1692 = vpop.f32.mrf.mxu0
  %v1693 = vadd.f32 %v1531, %v1692
  %v1694 = vpop.f32.mrf.mxu0
  %v1695 = vadd.f32 %v1536, %v1694
  %v1696 = vpop.f32.mrf.mxu0
  %v1697 = vadd.f32 %v1536, %v1696
  %1698 = vmatprep.mubr.bf16.mxu0 0
  %1699 = vmatmul.mubr.bf16.gmra.mxu0 %v1587
  %v1700 = vpop.f32.mrf.mxu0
  %v1701 = vadd.f32 %v1541, %v1700
  %v1702 = vpop.f32.mrf.mxu0
  %v1703 = vadd.f32 %v1541, %v1702
  %v1704 = vpop.f32.mrf.mxu0
  %v1705 = vadd.f32 %v1546, %v1704
  %v1706 = vpop.f32.mrf.mxu0
  %v1707 = vadd.f32 %v1546, %v1706
  %1708 = vdwg.mxu0
  %1709 = vmatprep.subr.bf16.mxu0 %v1431
  %1710 = vmatpush1.bf16.msra.mxu0 %v1430
  %1711 = vmatprep.subr.bf16.mxu0 %v1423
  %1712 = vmatpush1.bf16.msra.mxu0 %v1422
  %1713 = vmatprep.subr.bf16.mxu0 %v1415
  %1714 = vmatpush1.bf16.msra.mxu0 %v1414
  %1715 = vmatprep.subr.bf16.mxu0 %v1407
  %1716 = vmatpush1.bf16.msra.mxu0 %v1406
  %1717 = vmatprep.subr.bf16.mxu0 %v1399
  %1718 = vmatpush1.bf16.msra.mxu0 %v1398
  %1719 = vmatprep.subr.bf16.mxu0 %v1391
  %1720 = vmatpush1.bf16.msra.mxu0 %v1390
  %1721 = vmatprep.subr.bf16.mxu0 %v1383
  %1722 = vmatpush1.bf16.msra.mxu0 %v1382
  %1723 = vmatprep.subr.bf16.mxu0 %v1375
  %1724 = vmatpush1.bf16.msra.mxu0 %v1374
  %1725 = vmatprep.subr.bf16.mxu0 0
  %1726 = vmatpush2.bf16.msra.mxu0 0
  %1727 = vmatprep.subr.bf16.mxu0 0
  %1728 = vmatpush2.bf16.msra.mxu0 0
  %1729 = vmatprep.subr.bf16.mxu0 0
  %1730 = vmatpush2.bf16.msra.mxu0 0
  %1731 = vmatprep.subr.bf16.mxu0 0
  %1732 = vmatpush2.bf16.msra.mxu0 0
  %1733 = vmatprep.subr.bf16.mxu0 0
  %1734 = vmatpush2.bf16.msra.mxu0 0
  %1735 = vmatprep.subr.bf16.mxu0 0
  %1736 = vmatpush2.bf16.msra.mxu0 0
  %1737 = vmatprep.subr.bf16.mxu0 0
  %1738 = vmatpush2.bf16.msra.mxu0 0
  %1739 = vmatprep.subr.bf16.mxu0 0
  %1740 = vmatpush2.bf16.msra.mxu0 0
  %1741 = vmatprep.mubr.bf16.mxu0 0
  %1742 = vmatmul.mubr.bf16.gmra.mxu0 %v1580
  %v1743 = vpop.f32.mrf.mxu0
  %v1744 = vadd.f32 %v1471, %v1743
  %v1745 = vpop.f32.mrf.mxu0
  %v1746 = vadd.f32 %v1471, %v1745
  %v1747 = vpop.f32.mrf.mxu0
  %v1748 = vadd.f32 %v1476, %v1747
  %v1749 = vpop.f32.mrf.mxu0
  %v1750 = vadd.f32 %v1476, %v1749
  %1751 = vmatprep.mubr.bf16.mxu0 0
  %1752 = vmatmul.mubr.bf16.gmra.mxu0 %v1581
  %v1753 = vpop.f32.mrf.mxu0
  %v1754 = vadd.f32 %v1481, %v1753
  %v1755 = vpop.f32.mrf.mxu0
  %v1756 = vadd.f32 %v1481, %v1755
  %v1757 = vpop.f32.mrf.mxu0
  %v1758 = vadd.f32 %v1486, %v1757
  %v1759 = vpop.f32.mrf.mxu0
  %v1760 = vadd.f32 %v1486, %v1759
  %1761 = vmatprep.mubr.bf16.mxu0 0
  %1762 = vmatmul.mubr.bf16.gmra.mxu0 %v1582
  %v1763 = vpop.f32.mrf.mxu0
  %v1764 = vadd.f32 %v1491, %v1763
  %v1765 = vpop.f32.mrf.mxu0
  %v1766 = vadd.f32 %v1491, %v1765
  %v1767 = vpop.f32.mrf.mxu0
  %v1768 = vadd.f32 %v1496, %v1767
  %v1769 = vpop.f32.mrf.mxu0
  %v1770 = vadd.f32 %v1496, %v1769
  %1771 = vmatprep.mubr.bf16.mxu0 0
  %1772 = vmatmul.mubr.bf16.gmra.mxu0 %v1583
  %v1773 = vpop.f32.mrf.mxu0
  %v1774 = vadd.f32 %v1501, %v1773
  %v1775 = vpop.f32.mrf.mxu0
  %v1776 = vadd.f32 %v1501, %v1775
  %v1777 = vpop.f32.mrf.mxu0
  %v1778 = vadd.f32 %v1506, %v1777
  %v1779 = vpop.f32.mrf.mxu0
  %v1780 = vadd.f32 %v1506, %v1779
  %1781 = vmatprep.mubr.bf16.mxu0 0
  %1782 = vmatmul.mubr.bf16.gmra.mxu0 %v1584
  %v1783 = vpop.f32.mrf.mxu0
  %v1784 = vadd.f32 %v1511, %v1783
  %v1785 = vpop.f32.mrf.mxu0
  %v1786 = vadd.f32 %v1511, %v1785
  %v1787 = vpop.f32.mrf.mxu0
  %v1788 = vadd.f32 %v1516, %v1787
  %v1789 = vpop.f32.mrf.mxu0
  %v1790 = vadd.f32 %v1516, %v1789
  %1791 = vmatprep.mubr.bf16.mxu0 0
  %1792 = vmatmul.mubr.bf16.gmra.mxu0 %v1585
  %v1793 = vpop.f32.mrf.mxu0
  %v1794 = vadd.f32 %v1521, %v1793
  %v1795 = vpop.f32.mrf.mxu0
  %v1796 = vadd.f32 %v1521, %v1795
  %v1797 = vpop.f32.mrf.mxu0
  %v1798 = vadd.f32 %v1526, %v1797
  %v1799 = vpop.f32.mrf.mxu0
  %v1800 = vadd.f32 %v1526, %v1799
  %1801 = vmatprep.mubr.bf16.mxu0 0
  %1802 = vmatmul.mubr.bf16.gmra.mxu0 %v1586
  %v1803 = vpop.f32.mrf.mxu0
  %v1804 = vadd.f32 %v1531, %v1803
  %v1805 = vpop.f32.mrf.mxu0
  %v1806 = vadd.f32 %v1531, %v1805
  %v1807 = vpop.f32.mrf.mxu0
  %v1808 = vadd.f32 %v1536, %v1807
  %v1809 = vpop.f32.mrf.mxu0
  %v1810 = vadd.f32 %v1536, %v1809
  %1811 = vmatprep.mubr.bf16.mxu0 0
  %1812 = vmatmul.mubr.bf16.gmra.mxu0 %v1587
  %v1813 = vpop.f32.mrf.mxu0
  %v1814 = vadd.f32 %v1541, %v1813
  %v1815 = vpop.f32.mrf.mxu0
  %v1816 = vadd.f32 %v1541, %v1815
  %v1817 = vpop.f32.mrf.mxu0
  %v1818 = vadd.f32 %v1546, %v1817
  %v1819 = vpop.f32.mrf.mxu0
  %v1820 = vadd.f32 %v1546, %v1819
  %1821 = vdwg.mxu0
  %1822 = vmatprep.subr.bf16.mxu0 %v1433
  %1823 = vmatpush1.bf16.msra.mxu0 %v1432
  %1824 = vmatprep.subr.bf16.mxu0 %v1425
  %1825 = vmatpush1.bf16.msra.mxu0 %v1424
  %1826 = vmatprep.subr.bf16.mxu0 %v1417
  %1827 = vmatpush1.bf16.msra.mxu0 %v1416
  %1828 = vmatprep.subr.bf16.mxu0 %v1409
  %1829 = vmatpush1.bf16.msra.mxu0 %v1408
  %1830 = vmatprep.subr.bf16.mxu0 %v1401
  %1831 = vmatpush1.bf16.msra.mxu0 %v1400
  %1832 = vmatprep.subr.bf16.mxu0 %v1393
  %1833 = vmatpush1.bf16.msra.mxu0 %v1392
  %1834 = vmatprep.subr.bf16.mxu0 %v1385
  %1835 = vmatpush1.bf16.msra.mxu0 %v1384
  %1836 = vmatprep.subr.bf16.mxu0 %v1377
  %1837 = vmatpush1.bf16.msra.mxu0 %v1376
  %1838 = vmatprep.subr.bf16.mxu0 0
  %1839 = vmatpush2.bf16.msra.mxu0 0
  %1840 = vmatprep.subr.bf16.mxu0 0
  %1841 = vmatpush2.bf16.msra.mxu0 0
  %1842 = vmatprep.subr.bf16.mxu0 0
  %1843 = vmatpush2.bf16.msra.mxu0 0
  %1844 = vmatprep.subr.bf16.mxu0 0
  %1845 = vmatpush2.bf16.msra.mxu0 0
  %1846 = vmatprep.subr.bf16.mxu0 0
  %1847 = vmatpush2.bf16.msra.mxu0 0
  %1848 = vmatprep.subr.bf16.mxu0 0
  %1849 = vmatpush2.bf16.msra.mxu0 0
  %1850 = vmatprep.subr.bf16.mxu0 0
  %1851 = vmatpush2.bf16.msra.mxu0 0
  %1852 = vmatprep.subr.bf16.mxu0 0
  %1853 = vmatpush2.bf16.msra.mxu0 0
  %1854 = vmatprep.mubr.bf16.mxu0 0
  %1855 = vmatmul.mubr.bf16.gmra.mxu0 %v1580
  %v1856 = vpop.f32.mrf.mxu0
  %v1857 = vadd.f32 %v1471, %v1856
  %v1858 = vpop.f32.mrf.mxu0
  %v1859 = vadd.f32 %v1471, %v1858
  %v1860 = vpop.f32.mrf.mxu0
  %v1861 = vadd.f32 %v1476, %v1860
  %v1862 = vpop.f32.mrf.mxu0
  %v1863 = vadd.f32 %v1476, %v1862
  %1864 = vmatprep.mubr.bf16.mxu0 0
  %1865 = vmatmul.mubr.bf16.gmra.mxu0 %v1581
  %v1866 = vpop.f32.mrf.mxu0
  %v1867 = vadd.f32 %v1481, %v1866
  %v1868 = vpop.f32.mrf.mxu0
  %v1869 = vadd.f32 %v1481, %v1868
  %v1870 = vpop.f32.mrf.mxu0
  %v1871 = vadd.f32 %v1486, %v1870
  %v1872 = vpop.f32.mrf.mxu0
  %v1873 = vadd.f32 %v1486, %v1872
  %1874 = vmatprep.mubr.bf16.mxu0 0
  %1875 = vmatmul.mubr.bf16.gmra.mxu0 %v1582
  %v1876 = vpop.f32.mrf.mxu0
  %v1877 = vadd.f32 %v1491, %v1876
  %v1878 = vpop.f32.mrf.mxu0
  %v1879 = vadd.f32 %v1491, %v1878
  %v1880 = vpop.f32.mrf.mxu0
  %v1881 = vadd.f32 %v1496, %v1880
  %v1882 = vpop.f32.mrf.mxu0
  %v1883 = vadd.f32 %v1496, %v1882
  %1884 = vmatprep.mubr.bf16.mxu0 0
  %1885 = vmatmul.mubr.bf16.gmra.mxu0 %v1583
  %v1886 = vpop.f32.mrf.mxu0
  %v1887 = vadd.f32 %v1501, %v1886
  %v1888 = vpop.f32.mrf.mxu0
  %v1889 = vadd.f32 %v1501, %v1888
  %v1890 = vpop.f32.mrf.mxu0
  %v1891 = vadd.f32 %v1506, %v1890
  %v1892 = vpop.f32.mrf.mxu0
  %v1893 = vadd.f32 %v1506, %v1892
  %1894 = vmatprep.mubr.bf16.mxu0 0
  %1895 = vmatmul.mubr.bf16.gmra.mxu0 %v1584
  %v1896 = vpop.f32.mrf.mxu0
  %v1897 = vadd.f32 %v1511, %v1896
  %v1898 = vpop.f32.mrf.mxu0
  %v1899 = vadd.f32 %v1511, %v1898
  %v1900 = vpop.f32.mrf.mxu0
  %v1901 = vadd.f32 %v1516, %v1900
  %v1902 = vpop.f32.mrf.mxu0
  %v1903 = vadd.f32 %v1516, %v1902
  %1904 = vmatprep.mubr.bf16.mxu0 0
  %1905 = vmatmul.mubr.bf16.gmra.mxu0 %v1585
  %v1906 = vpop.f32.mrf.mxu0
  %v1907 = vadd.f32 %v1521, %v1906
  %v1908 = vpop.f32.mrf.mxu0
  %v1909 = vadd.f32 %v1521, %v1908
  %v1910 = vpop.f32.mrf.mxu0
  %v1911 = vadd.f32 %v1526, %v1910
  %v1912 = vpop.f32.mrf.mxu0
  %v1913 = vadd.f32 %v1526, %v1912
  %1914 = vmatprep.mubr.bf16.mxu0 0
  %1915 = vmatmul.mubr.bf16.gmra.mxu0 %v1586
  %v1916 = vpop.f32.mrf.mxu0
  %v1917 = vadd.f32 %v1531, %v1916
  %v1918 = vpop.f32.mrf.mxu0
  %v1919 = vadd.f32 %v1531, %v1918
  %v1920 = vpop.f32.mrf.mxu0
  %v1921 = vadd.f32 %v1536, %v1920
  %v1922 = vpop.f32.mrf.mxu0
  %v1923 = vadd.f32 %v1536, %v1922
  %1924 = vmatprep.mubr.bf16.mxu0 0
  %1925 = vmatmul.mubr.bf16.gmra.mxu0 %v1587
  %v1926 = vpop.f32.mrf.mxu0
  %v1927 = vadd.f32 %v1541, %v1926
  %v1928 = vpop.f32.mrf.mxu0
  %v1929 = vadd.f32 %v1541, %v1928
  %v1930 = vpop.f32.mrf.mxu0
  %v1931 = vadd.f32 %v1546, %v1930
  %v1932 = vpop.f32.mrf.mxu0
  %v1933 = vadd.f32 %v1546, %v1932
  %1934 = vdwg.mxu0
  %1935 = vmatprep.subr.bf16.mxu0 %v1435
  %1936 = vmatpush1.bf16.msra.mxu0 %v1434
  %1937 = vmatprep.subr.bf16.mxu0 %v1427
  %1938 = vmatpush1.bf16.msra.mxu0 %v1426
  %1939 = vmatprep.subr.bf16.mxu0 %v1419
  %1940 = vmatpush1.bf16.msra.mxu0 %v1418
  %1941 = vmatprep.subr.bf16.mxu0 %v1411
  %1942 = vmatpush1.bf16.msra.mxu0 %v1410
  %1943 = vmatprep.subr.bf16.mxu0 %v1403
  %1944 = vmatpush1.bf16.msra.mxu0 %v1402
  %1945 = vmatprep.subr.bf16.mxu0 %v1395
  %1946 = vmatpush1.bf16.msra.mxu0 %v1394
  %1947 = vmatprep.subr.bf16.mxu0 %v1387
  %1948 = vmatpush1.bf16.msra.mxu0 %v1386
  %1949 = vmatprep.subr.bf16.mxu0 %v1379
  %1950 = vmatpush1.bf16.msra.mxu0 %v1378
  %1951 = vmatprep.subr.bf16.mxu0 0
  %1952 = vmatpush2.bf16.msra.mxu0 0
  %1953 = vmatprep.subr.bf16.mxu0 0
  %1954 = vmatpush2.bf16.msra.mxu0 0
  %1955 = vmatprep.subr.bf16.mxu0 0
  %1956 = vmatpush2.bf16.msra.mxu0 0
  %1957 = vmatprep.subr.bf16.mxu0 0
  %1958 = vmatpush2.bf16.msra.mxu0 0
  %1959 = vmatprep.subr.bf16.mxu0 0
  %1960 = vmatpush2.bf16.msra.mxu0 0
  %1961 = vmatprep.subr.bf16.mxu0 0
  %1962 = vmatpush2.bf16.msra.mxu0 0
  %1963 = vmatprep.subr.bf16.mxu0 0
  %1964 = vmatpush2.bf16.msra.mxu0 0
  %1965 = vmatprep.subr.bf16.mxu0 0
  %1966 = vmatpush2.bf16.msra.mxu0 0
  %1967 = vmatprep.mubr.bf16.mxu0 0
  %1968 = vmatmul.mubr.bf16.gmra.mxu0 %v1580
  %v1969 = vpop.f32.mrf.mxu0
  %v1970 = vadd.f32 %v1471, %v1969
  %v1971 = vpop.f32.mrf.mxu0
  %v1972 = vadd.f32 %v1471, %v1971
  %v1973 = vpop.f32.mrf.mxu0
  %v1974 = vadd.f32 %v1476, %v1973
  %v1975 = vpop.f32.mrf.mxu0
  %v1976 = vadd.f32 %v1476, %v1975
  %1977 = vmatprep.mubr.bf16.mxu0 0
  %1978 = vmatmul.mubr.bf16.gmra.mxu0 %v1581
  %v1979 = vpop.f32.mrf.mxu0
  %v1980 = vadd.f32 %v1481, %v1979
  %v1981 = vpop.f32.mrf.mxu0
  %v1982 = vadd.f32 %v1481, %v1981
  %v1983 = vpop.f32.mrf.mxu0
  %v1984 = vadd.f32 %v1486, %v1983
  %v1985 = vpop.f32.mrf.mxu0
  %v1986 = vadd.f32 %v1486, %v1985
  %1987 = vmatprep.mubr.bf16.mxu0 0
  %1988 = vmatmul.mubr.bf16.gmra.mxu0 %v1582
  %v1989 = vpop.f32.mrf.mxu0
  %v1990 = vadd.f32 %v1491, %v1989
  %v1991 = vpop.f32.mrf.mxu0
  %v1992 = vadd.f32 %v1491, %v1991
  %v1993 = vpop.f32.mrf.mxu0
  %v1994 = vadd.f32 %v1496, %v1993
  %v1995 = vpop.f32.mrf.mxu0
  %v1996 = vadd.f32 %v1496, %v1995
  %1997 = vmatprep.mubr.bf16.mxu0 0
  %1998 = vmatmul.mubr.bf16.gmra.mxu0 %v1583
  %v1999 = vpop.f32.mrf.mxu0
  %v2000 = vadd.f32 %v1501, %v1999
  %v2001 = vpop.f32.mrf.mxu0
  %v2002 = vadd.f32 %v1501, %v2001
  %v2003 = vpop.f32.mrf.mxu0
  %v2004 = vadd.f32 %v1506, %v2003
  %v2005 = vpop.f32.mrf.mxu0
  %v2006 = vadd.f32 %v1506, %v2005
  %2007 = vmatprep.mubr.bf16.mxu0 0
  %2008 = vmatmul.mubr.bf16.gmra.mxu0 %v1584
  %v2009 = vpop.f32.mrf.mxu0
  %v2010 = vadd.f32 %v1511, %v2009
  %v2011 = vpop.f32.mrf.mxu0
  %v2012 = vadd.f32 %v1511, %v2011
  %v2013 = vpop.f32.mrf.mxu0
  %v2014 = vadd.f32 %v1516, %v2013
  %v2015 = vpop.f32.mrf.mxu0
  %v2016 = vadd.f32 %v1516, %v2015
  %2017 = vmatprep.mubr.bf16.mxu0 0
  %2018 = vmatmul.mubr.bf16.gmra.mxu0 %v1585
  %v2019 = vpop.f32.mrf.mxu0
  %v2020 = vadd.f32 %v1521, %v2019
  %v2021 = vpop.f32.mrf.mxu0
  %v2022 = vadd.f32 %v1521, %v2021
  %v2023 = vpop.f32.mrf.mxu0
  %v2024 = vadd.f32 %v1526, %v2023
  %v2025 = vpop.f32.mrf.mxu0
  %v2026 = vadd.f32 %v1526, %v2025
  %2027 = vmatprep.mubr.bf16.mxu0 0
  %2028 = vmatmul.mubr.bf16.gmra.mxu0 %v1586
  %v2029 = vpop.f32.mrf.mxu0
  %v2030 = vadd.f32 %v1531, %v2029
  %v2031 = vpop.f32.mrf.mxu0
  %v2032 = vadd.f32 %v1531, %v2031
  %v2033 = vpop.f32.mrf.mxu0
  %v2034 = vadd.f32 %v1536, %v2033
  %v2035 = vpop.f32.mrf.mxu0
  %v2036 = vadd.f32 %v1536, %v2035
  %2037 = vmatprep.mubr.bf16.mxu0 0
  %2038 = vmatmul.mubr.bf16.gmra.mxu0 %v1587
  %v2039 = vpop.f32.mrf.mxu0
  %v2040 = vadd.f32 %v1541, %v2039
  %v2041 = vpop.f32.mrf.mxu0
  %v2042 = vadd.f32 %v1541, %v2041
  %v2043 = vpop.f32.mrf.mxu0
  %v2044 = vadd.f32 %v1546, %v2043
  %v2045 = vpop.f32.mrf.mxu0
  %v2046 = vadd.f32 %v1546, %v2045
  %2047 = vdwg.mxu0
  %v2048 = vmax.f32 %v1631, 0.0
  %v2049 = vmax.f32 %v1633, 0.0
  %v2050 = vmax.f32 %v1744, 0.0
  %v2051 = vmax.f32 %v1746, 0.0
  %v2052 = vmax.f32 %v1857, 0.0
  %v2053 = vmax.f32 %v1859, 0.0
  %v2054 = vmax.f32 %v1970, 0.0
  %v2055 = vmax.f32 %v1972, 0.0
  %v2056 = vmax.f32 %v1635, 0.0
  %v2057 = vmax.f32 %v1637, 0.0
  %v2058 = vmax.f32 %v1748, 0.0
  %v2059 = vmax.f32 %v1750, 0.0
  %v2060 = vmax.f32 %v1861, 0.0
  %v2061 = vmax.f32 %v1863, 0.0
  %v2062 = vmax.f32 %v1974, 0.0
  %v2063 = vmax.f32 %v1976, 0.0
  %v2064 = vmax.f32 %v1641, 0.0
  %v2065 = vmax.f32 %v1643, 0.0
  %v2066 = vmax.f32 %v1754, 0.0
  %v2067 = vmax.f32 %v1756, 0.0
  %v2068 = vmax.f32 %v1867, 0.0
  %v2069 = vmax.f32 %v1869, 0.0
  %v2070 = vmax.f32 %v1980, 0.0
  %v2071 = vmax.f32 %v1982, 0.0
  %v2072 = vmax.f32 %v1645, 0.0
  %v2073 = vmax.f32 %v1647, 0.0
  %v2074 = vmax.f32 %v1758, 0.0
  %v2075 = vmax.f32 %v1760, 0.0
  %v2076 = vmax.f32 %v1871, 0.0
  %v2077 = vmax.f32 %v1873, 0.0
  %v2078 = vmax.f32 %v1984, 0.0
  %v2079 = vmax.f32 %v1986, 0.0
  %v2080 = vmax.f32 %v1651, 0.0
  %v2081 = vmax.f32 %v1653, 0.0
  %v2082 = vmax.f32 %v1764, 0.0
  %v2083 = vmax.f32 %v1766, 0.0
  %v2084 = vmax.f32 %v1877, 0.0
  %v2085 = vmax.f32 %v1879, 0.0
  %v2086 = vmax.f32 %v1990, 0.0
  %v2087 = vmax.f32 %v1992, 0.0
  %v2088 = vmax.f32 %v1655, 0.0
  %v2089 = vmax.f32 %v1657, 0.0
  %v2090 = vmax.f32 %v1768, 0.0
  %v2091 = vmax.f32 %v1770, 0.0
  %v2092 = vmax.f32 %v1881, 0.0
  %v2093 = vmax.f32 %v1883, 0.0
  %v2094 = vmax.f32 %v1994, 0.0
  %v2095 = vmax.f32 %v1996, 0.0
  %v2096 = vmax.f32 %v1661, 0.0
  %v2097 = vmax.f32 %v1663, 0.0
  %v2098 = vmax.f32 %v1774, 0.0
  %v2099 = vmax.f32 %v1776, 0.0
  %v2100 = vmax.f32 %v1887, 0.0
  %v2101 = vmax.f32 %v1889, 0.0
  %v2102 = vmax.f32 %v2000, 0.0
  %v2103 = vmax.f32 %v2002, 0.0
  %v2104 = vmax.f32 %v1665, 0.0
  %v2105 = vmax.f32 %v1667, 0.0
  %v2106 = vmax.f32 %v1778, 0.0
  %v2107 = vmax.f32 %v1780, 0.0
  %v2108 = vmax.f32 %v1891, 0.0
  %v2109 = vmax.f32 %v1893, 0.0
  %v2110 = vmax.f32 %v2004, 0.0
  %v2111 = vmax.f32 %v2006, 0.0
  %v2112 = vmax.f32 %v1671, 0.0
  %v2113 = vmax.f32 %v1673, 0.0
  %v2114 = vmax.f32 %v1784, 0.0
  %v2115 = vmax.f32 %v1786, 0.0
  %v2116 = vmax.f32 %v1897, 0.0
  %v2117 = vmax.f32 %v1899, 0.0
  %v2118 = vmax.f32 %v2010, 0.0
  %v2119 = vmax.f32 %v2012, 0.0
  %v2120 = vmax.f32 %v1675, 0.0
  %v2121 = vmax.f32 %v1677, 0.0
  %v2122 = vmax.f32 %v1788, 0.0
  %v2123 = vmax.f32 %v1790, 0.0
  %v2124 = vmax.f32 %v1901, 0.0
  %v2125 = vmax.f32 %v1903, 0.0
  %v2126 = vmax.f32 %v2014, 0.0
  %v2127 = vmax.f32 %v2016, 0.0
  %v2128 = vmax.f32 %v1681, 0.0
  %v2129 = vmax.f32 %v1683, 0.0
  %v2130 = vmax.f32 %v1794, 0.0
  %v2131 = vmax.f32 %v1796, 0.0
  %v2132 = vmax.f32 %v1907, 0.0
  %v2133 = vmax.f32 %v1909, 0.0
  %v2134 = vmax.f32 %v2020, 0.0
  %v2135 = vmax.f32 %v2022, 0.0
  %v2136 = vmax.f32 %v1685, 0.0
  %v2137 = vmax.f32 %v1687, 0.0
  %v2138 = vmax.f32 %v1798, 0.0
  %v2139 = vmax.f32 %v1800, 0.0
  %v2140 = vmax.f32 %v1911, 0.0
  %v2141 = vmax.f32 %v1913, 0.0
  %v2142 = vmax.f32 %v2024, 0.0
  %v2143 = vmax.f32 %v2026, 0.0
  %v2144 = vmax.f32 %v1691, 0.0
  %v2145 = vmax.f32 %v1693, 0.0
  %v2146 = vmax.f32 %v1804, 0.0
  %v2147 = vmax.f32 %v1806, 0.0
  %v2148 = vmax.f32 %v1917, 0.0
  %v2149 = vmax.f32 %v1919, 0.0
  %v2150 = vmax.f32 %v2030, 0.0
  %v2151 = vmax.f32 %v2032, 0.0
  %v2152 = vmax.f32 %v1695, 0.0
  %v2153 = vmax.f32 %v1697, 0.0
  %v2154 = vmax.f32 %v1808, 0.0
  %v2155 = vmax.f32 %v1810, 0.0
  %v2156 = vmax.f32 %v1921, 0.0
  %v2157 = vmax.f32 %v1923, 0.0
  %v2158 = vmax.f32 %v2034, 0.0
  %v2159 = vmax.f32 %v2036, 0.0
  %v2160 = vmax.f32 %v1701, 0.0
  %v2161 = vmax.f32 %v1703, 0.0
  %v2162 = vmax.f32 %v1814, 0.0
  %v2163 = vmax.f32 %v1816, 0.0
  %v2164 = vmax.f32 %v1927, 0.0
  %v2165 = vmax.f32 %v1929, 0.0
  %v2166 = vmax.f32 %v2040, 0.0
  %v2167 = vmax.f32 %v2042, 0.0
  %v2168 = vmax.f32 %v1705, 0.0
  %v2169 = vmax.f32 %v1707, 0.0
  %v2170 = vmax.f32 %v1818, 0.0
  %v2171 = vmax.f32 %v1820, 0.0
  %v2172 = vmax.f32 %v1931, 0.0
  %v2173 = vmax.f32 %v1933, 0.0
  %v2174 = vmax.f32 %v2044, 0.0
  %v2175 = vmax.f32 %v2046, 0.0
  %v2176 = vld [vmem:[%s5] sm:$0xff]
  %v2177 = vld [vmem:[%s5 + $0x8] sm:$0xff]
  %v2178 = vld [vmem:[%s5 + $0x10] sm:$0xff]
  %v2179 = vld [vmem:[%s5 + $0x18] sm:$0xff]
  %v2180 = vld [vmem:[%s5 + $0x20] sm:$0xff]
  %v2181 = vld [vmem:[%s5 + $0x28] sm:$0xff]
  %v2182 = vld [vmem:[%s5 + $0x30] sm:$0xff]
  %v2183 = vld [vmem:[%s5 + $0x38] sm:$0xff]
  %v2184 = vld [vmem:[%s5 + $0x40] sm:$0xff]
  %v2185 = vld [vmem:[%s5 + $0x48] sm:$0xff]
  %v2186 = vld [vmem:[%s5 + $0x50] sm:$0xff]
  %v2187 = vld [vmem:[%s5 + $0x58] sm:$0xff]
  %v2188 = vld [vmem:[%s5 + $0x60] sm:$0xff]
  %v2189 = vld [vmem:[%s5 + $0x68] sm:$0xff]
  %v2190 = vld [vmem:[%s5 + $0x70] sm:$0xff]
  %v2191 = vld [vmem:[%s5 + $0x78] sm:$0xff]
  %2193 = vset.pattern.permute.xlu0 0
  %2194 = vperm.xlu0 %2193, %v2176
  %v2195 = vpop.permute.xlu0 %2194
  %2198 = vset.pattern.permute.xlu0 0
  %2199 = vperm.xlu0 %2198, %v2177
  %v2200 = vpop.permute.xlu0 %2199
  %2203 = vset.pattern.permute.xlu0 0
  %2204 = vperm.xlu0 %2203, %v2178
  %v2205 = vpop.permute.xlu0 %2204
  %2208 = vset.pattern.permute.xlu0 0
  %2209 = vperm.xlu0 %2208, %v2179
  %v2210 = vpop.permute.xlu0 %2209
  %2213 = vset.pattern.permute.xlu0 0
  %2214 = vperm.xlu0 %2213, %v2180
  %v2215 = vpop.permute.xlu0 %2214
  %2218 = vset.pattern.permute.xlu0 0
  %2219 = vperm.xlu0 %2218, %v2181
  %v2220 = vpop.permute.xlu0 %2219
  %2223 = vset.pattern.permute.xlu0 0
  %2224 = vperm.xlu0 %2223, %v2182
  %v2225 = vpop.permute.xlu0 %2224
  %2228 = vset.pattern.permute.xlu0 0
  %2229 = vperm.xlu0 %2228, %v2183
  %v2230 = vpop.permute.xlu0 %2229
  %2233 = vset.pattern.permute.xlu0 0
  %2234 = vperm.xlu0 %2233, %v2184
  %v2235 = vpop.permute.xlu0 %2234
  %2238 = vset.pattern.permute.xlu0 0
  %2239 = vperm.xlu0 %2238, %v2185
  %v2240 = vpop.permute.xlu0 %2239
  %2243 = vset.pattern.permute.xlu0 0
  %2244 = vperm.xlu0 %2243, %v2186
  %v2245 = vpop.permute.xlu0 %2244
  %2248 = vset.pattern.permute.xlu0 0
  %2249 = vperm.xlu0 %2248, %v2187
  %v2250 = vpop.permute.xlu0 %2249
  %2253 = vset.pattern.permute.xlu0 0
  %2254 = vperm.xlu0 %2253, %v2188
  %v2255 = vpop.permute.xlu0 %2254
  %2258 = vset.pattern.permute.xlu0 0
  %2259 = vperm.xlu0 %2258, %v2189
  %v2260 = vpop.permute.xlu0 %2259
  %2263 = vset.pattern.permute.xlu0 0
  %2264 = vperm.xlu0 %2263, %v2190
  %v2265 = vpop.permute.xlu0 %2264
  %2268 = vset.pattern.permute.xlu0 0
  %2269 = vperm.xlu0 %2268, %v2191
  %v2270 = vpop.permute.xlu0 %2269
  %v2272 = vmul.f32 %v2048, %v2195
  %v2273 = vmul.f32 %v2049, %v2195
  %v2274 = vmul.f32 %v2050, %v2195
  %v2275 = vmul.f32 %v2051, %v2195
  %v2276 = vmul.f32 %v2052, %v2195
  %v2277 = vmul.f32 %v2053, %v2195
  %v2278 = vmul.f32 %v2054, %v2195
  %v2279 = vmul.f32 %v2055, %v2195
  %v2280 = vmul.f32 %v2056, %v2200
  %v2281 = vmul.f32 %v2057, %v2200
  %v2282 = vmul.f32 %v2058, %v2200
  %v2283 = vmul.f32 %v2059, %v2200
  %v2284 = vmul.f32 %v2060, %v2200
  %v2285 = vmul.f32 %v2061, %v2200
  %v2286 = vmul.f32 %v2062, %v2200
  %v2287 = vmul.f32 %v2063, %v2200
  %v2288 = vmul.f32 %v2064, %v2205
  %v2289 = vmul.f32 %v2065, %v2205
  %v2290 = vmul.f32 %v2066, %v2205
  %v2291 = vmul.f32 %v2067, %v2205
  %v2292 = vmul.f32 %v2068, %v2205
  %v2293 = vmul.f32 %v2069, %v2205
  %v2294 = vmul.f32 %v2070, %v2205
  %v2295 = vmul.f32 %v2071, %v2205
  %v2296 = vmul.f32 %v2072, %v2210
  %v2297 = vmul.f32 %v2073, %v2210
  %v2298 = vmul.f32 %v2074, %v2210
  %v2299 = vmul.f32 %v2075, %v2210
  %v2300 = vmul.f32 %v2076, %v2210
  %v2301 = vmul.f32 %v2077, %v2210
  %v2302 = vmul.f32 %v2078, %v2210
  %v2303 = vmul.f32 %v2079, %v2210
  %v2304 = vmul.f32 %v2080, %v2215
  %v2305 = vmul.f32 %v2081, %v2215
  %v2306 = vmul.f32 %v2082, %v2215
  %v2307 = vmul.f32 %v2083, %v2215
  %v2308 = vmul.f32 %v2084, %v2215
  %v2309 = vmul.f32 %v2085, %v2215
  %v2310 = vmul.f32 %v2086, %v2215
  %v2311 = vmul.f32 %v2087, %v2215
  %v2312 = vmul.f32 %v2088, %v2220
  %v2313 = vmul.f32 %v2089, %v2220
  %v2314 = vmul.f32 %v2090, %v2220
  %v2315 = vmul.f32 %v2091, %v2220
  %v2316 = vmul.f32 %v2092, %v2220
  %v2317 = vmul.f32 %v2093, %v2220
  %v2318 = vmul.f32 %v2094, %v2220
  %v2319 = vmul.f32 %v2095, %v2220
  %v2320 = vmul.f32 %v2096, %v2225
  %v2321 = vmul.f32 %v2097, %v2225
  %v2322 = vmul.f32 %v2098, %v2225
  %v2323 = vmul.f32 %v2099, %v2225
  %v2324 = vmul.f32 %v2100, %v2225
  %v2325 = vmul.f32 %v2101, %v2225
  %v2326 = vmul.f32 %v2102, %v2225
  %v2327 = vmul.f32 %v2103, %v2225
  %v2328 = vmul.f32 %v2104, %v2230
  %v2329 = vmul.f32 %v2105, %v2230
  %v2330 = vmul.f32 %v2106, %v2230
  %v2331 = vmul.f32 %v2107, %v2230
  %v2332 = vmul.f32 %v2108, %v2230
  %v2333 = vmul.f32 %v2109, %v2230
  %v2334 = vmul.f32 %v2110, %v2230
  %v2335 = vmul.f32 %v2111, %v2230
  %v2336 = vmul.f32 %v2112, %v2235
  %v2337 = vmul.f32 %v2113, %v2235
  %v2338 = vmul.f32 %v2114, %v2235
  %v2339 = vmul.f32 %v2115, %v2235
  %v2340 = vmul.f32 %v2116, %v2235
  %v2341 = vmul.f32 %v2117, %v2235
  %v2342 = vmul.f32 %v2118, %v2235
  %v2343 = vmul.f32 %v2119, %v2235
  %v2344 = vmul.f32 %v2120, %v2240
  %v2345 = vmul.f32 %v2121, %v2240
  %v2346 = vmul.f32 %v2122, %v2240
  %v2347 = vmul.f32 %v2123, %v2240
  %v2348 = vmul.f32 %v2124, %v2240
  %v2349 = vmul.f32 %v2125, %v2240
  %v2350 = vmul.f32 %v2126, %v2240
  %v2351 = vmul.f32 %v2127, %v2240
  %v2352 = vmul.f32 %v2128, %v2245
  %v2353 = vmul.f32 %v2129, %v2245
  %v2354 = vmul.f32 %v2130, %v2245
  %v2355 = vmul.f32 %v2131, %v2245
  %v2356 = vmul.f32 %v2132, %v2245
  %v2357 = vmul.f32 %v2133, %v2245
  %v2358 = vmul.f32 %v2134, %v2245
  %v2359 = vmul.f32 %v2135, %v2245
  %v2360 = vmul.f32 %v2136, %v2250
  %v2361 = vmul.f32 %v2137, %v2250
  %v2362 = vmul.f32 %v2138, %v2250
  %v2363 = vmul.f32 %v2139, %v2250
  %v2364 = vmul.f32 %v2140, %v2250
  %v2365 = vmul.f32 %v2141, %v2250
  %v2366 = vmul.f32 %v2142, %v2250
  %v2367 = vmul.f32 %v2143, %v2250
  %v2368 = vmul.f32 %v2144, %v2255
  %v2369 = vmul.f32 %v2145, %v2255
  %v2370 = vmul.f32 %v2146, %v2255
  %v2371 = vmul.f32 %v2147, %v2255
  %v2372 = vmul.f32 %v2148, %v2255
  %v2373 = vmul.f32 %v2149, %v2255
  %v2374 = vmul.f32 %v2150, %v2255
  %v2375 = vmul.f32 %v2151, %v2255
  %v2376 = vmul.f32 %v2152, %v2260
  %v2377 = vmul.f32 %v2153, %v2260
  %v2378 = vmul.f32 %v2154, %v2260
  %v2379 = vmul.f32 %v2155, %v2260
  %v2380 = vmul.f32 %v2156, %v2260
  %v2381 = vmul.f32 %v2157, %v2260
  %v2382 = vmul.f32 %v2158, %v2260
  %v2383 = vmul.f32 %v2159, %v2260
  %v2384 = vmul.f32 %v2160, %v2265
  %v2385 = vmul.f32 %v2161, %v2265
  %v2386 = vmul.f32 %v2162, %v2265
  %v2387 = vmul.f32 %v2163, %v2265
  %v2388 = vmul.f32 %v2164, %v2265
  %v2389 = vmul.f32 %v2165, %v2265
  %v2390 = vmul.f32 %v2166, %v2265
  %v2391 = vmul.f32 %v2167, %v2265
  %v2392 = vmul.f32 %v2168, %v2270
  %v2393 = vmul.f32 %v2169, %v2270
  %v2394 = vmul.f32 %v2170, %v2270
  %v2395 = vmul.f32 %v2171, %v2270
  %v2396 = vmul.f32 %v2172, %v2270
  %v2397 = vmul.f32 %v2173, %v2270
  %v2398 = vmul.f32 %v2174, %v2270
  %v2399 = vmul.f32 %v2175, %v2270
  %v2400 = vadd.f32 %v2272, %v2280
  %v2401 = vadd.f32 %v2400, %v2288
  %v2402 = vadd.f32 %v2401, %v2296
  %v2403 = vadd.f32 %v2402, %v2304
  %v2404 = vadd.f32 %v2403, %v2312
  %v2405 = vadd.f32 %v2404, %v2320
  %v2406 = vadd.f32 %v2405, %v2328
  %v2407 = vadd.f32 %v2406, %v2336
  %v2408 = vadd.f32 %v2407, %v2344
  %v2409 = vadd.f32 %v2408, %v2352
  %v2410 = vadd.f32 %v2409, %v2360
  %v2411 = vadd.f32 %v2410, %v2368
  %v2412 = vadd.f32 %v2411, %v2376
  %v2413 = vadd.f32 %v2412, %v2384
  %v2414 = vadd.f32 %v2413, %v2392
  %v2415 = vrot.slane %v2414, 4
  %v2416 = vadd.f32 %v2414, %v2415
  %v2417 = vrot.slane %v2416, 2
  %v2418 = vadd.f32 %v2416, %v2417
  %v2419 = vrot.slane %v2418, 1
  %v2420 = vadd.f32 %v2418, %v2419
  %v2421 = vadd.f32 %v2273, %v2281
  %v2422 = vadd.f32 %v2421, %v2289
  %v2423 = vadd.f32 %v2422, %v2297
  %v2424 = vadd.f32 %v2423, %v2305
  %v2425 = vadd.f32 %v2424, %v2313
  %v2426 = vadd.f32 %v2425, %v2321
  %v2427 = vadd.f32 %v2426, %v2329
  %v2428 = vadd.f32 %v2427, %v2337
  %v2429 = vadd.f32 %v2428, %v2345
  %v2430 = vadd.f32 %v2429, %v2353
  %v2431 = vadd.f32 %v2430, %v2361
  %v2432 = vadd.f32 %v2431, %v2369
  %v2433 = vadd.f32 %v2432, %v2377
  %v2434 = vadd.f32 %v2433, %v2385
  %v2435 = vadd.f32 %v2434, %v2393
  %v2436 = vrot.slane %v2435, 4
  %v2437 = vadd.f32 %v2435, %v2436
  %v2438 = vrot.slane %v2437, 2
  %v2439 = vadd.f32 %v2437, %v2438
  %v2440 = vrot.slane %v2439, 1
  %v2441 = vadd.f32 %v2439, %v2440
  %v2442 = vadd.f32 %v2274, %v2282
  %v2443 = vadd.f32 %v2442, %v2290
  %v2444 = vadd.f32 %v2443, %v2298
  %v2445 = vadd.f32 %v2444, %v2306
  %v2446 = vadd.f32 %v2445, %v2314
  %v2447 = vadd.f32 %v2446, %v2322
  %v2448 = vadd.f32 %v2447, %v2330
  %v2449 = vadd.f32 %v2448, %v2338
  %v2450 = vadd.f32 %v2449, %v2346
  %v2451 = vadd.f32 %v2450, %v2354
  %v2452 = vadd.f32 %v2451, %v2362
  %v2453 = vadd.f32 %v2452, %v2370
  %v2454 = vadd.f32 %v2453, %v2378
  %v2455 = vadd.f32 %v2454, %v2386
  %v2456 = vadd.f32 %v2455, %v2394
  %v2457 = vrot.slane %v2456, 4
  %v2458 = vadd.f32 %v2456, %v2457
  %v2459 = vrot.slane %v2458, 2
  %v2460 = vadd.f32 %v2458, %v2459
  %v2461 = vrot.slane %v2460, 1
  %v2462 = vadd.f32 %v2460, %v2461
  %v2463 = vadd.f32 %v2275, %v2283
  %v2464 = vadd.f32 %v2463, %v2291
  %v2465 = vadd.f32 %v2464, %v2299
  %v2466 = vadd.f32 %v2465, %v2307
  %v2467 = vadd.f32 %v2466, %v2315
  %v2468 = vadd.f32 %v2467, %v2323
  %v2469 = vadd.f32 %v2468, %v2331
  %v2470 = vadd.f32 %v2469, %v2339
  %v2471 = vadd.f32 %v2470, %v2347
  %v2472 = vadd.f32 %v2471, %v2355
  %v2473 = vadd.f32 %v2472, %v2363
  %v2474 = vadd.f32 %v2473, %v2371
  %v2475 = vadd.f32 %v2474, %v2379
  %v2476 = vadd.f32 %v2475, %v2387
  %v2477 = vadd.f32 %v2476, %v2395
  %v2478 = vrot.slane %v2477, 4
  %v2479 = vadd.f32 %v2477, %v2478
  %v2480 = vrot.slane %v2479, 2
  %v2481 = vadd.f32 %v2479, %v2480
  %v2482 = vrot.slane %v2481, 1
  %v2483 = vadd.f32 %v2481, %v2482
  %v2484 = vadd.f32 %v2276, %v2284
  %v2485 = vadd.f32 %v2484, %v2292
  %v2486 = vadd.f32 %v2485, %v2300
  %v2487 = vadd.f32 %v2486, %v2308
  %v2488 = vadd.f32 %v2487, %v2316
  %v2489 = vadd.f32 %v2488, %v2324
  %v2490 = vadd.f32 %v2489, %v2332
  %v2491 = vadd.f32 %v2490, %v2340
  %v2492 = vadd.f32 %v2491, %v2348
  %v2493 = vadd.f32 %v2492, %v2356
  %v2494 = vadd.f32 %v2493, %v2364
  %v2495 = vadd.f32 %v2494, %v2372
  %v2496 = vadd.f32 %v2495, %v2380
  %v2497 = vadd.f32 %v2496, %v2388
  %v2498 = vadd.f32 %v2497, %v2396
  %v2499 = vrot.slane %v2498, 4
  %v2500 = vadd.f32 %v2498, %v2499
  %v2501 = vrot.slane %v2500, 2
  %v2502 = vadd.f32 %v2500, %v2501
  %v2503 = vrot.slane %v2502, 1
  %v2504 = vadd.f32 %v2502, %v2503
  %v2505 = vadd.f32 %v2277, %v2285
  %v2506 = vadd.f32 %v2505, %v2293
  %v2507 = vadd.f32 %v2506, %v2301
  %v2508 = vadd.f32 %v2507, %v2309
  %v2509 = vadd.f32 %v2508, %v2317
  %v2510 = vadd.f32 %v2509, %v2325
  %v2511 = vadd.f32 %v2510, %v2333
  %v2512 = vadd.f32 %v2511, %v2341
  %v2513 = vadd.f32 %v2512, %v2349
  %v2514 = vadd.f32 %v2513, %v2357
  %v2515 = vadd.f32 %v2514, %v2365
  %v2516 = vadd.f32 %v2515, %v2373
  %v2517 = vadd.f32 %v2516, %v2381
  %v2518 = vadd.f32 %v2517, %v2389
  %v2519 = vadd.f32 %v2518, %v2397
  %v2520 = vrot.slane %v2519, 4
  %v2521 = vadd.f32 %v2519, %v2520
  %v2522 = vrot.slane %v2521, 2
  %v2523 = vadd.f32 %v2521, %v2522
  %v2524 = vrot.slane %v2523, 1
  %v2525 = vadd.f32 %v2523, %v2524
  %v2526 = vadd.f32 %v2278, %v2286
  %v2527 = vadd.f32 %v2526, %v2294
  %v2528 = vadd.f32 %v2527, %v2302
  %v2529 = vadd.f32 %v2528, %v2310
  %v2530 = vadd.f32 %v2529, %v2318
  %v2531 = vadd.f32 %v2530, %v2326
  %v2532 = vadd.f32 %v2531, %v2334
  %v2533 = vadd.f32 %v2532, %v2342
  %v2534 = vadd.f32 %v2533, %v2350
  %v2535 = vadd.f32 %v2534, %v2358
  %v2536 = vadd.f32 %v2535, %v2366
  %v2537 = vadd.f32 %v2536, %v2374
  %v2538 = vadd.f32 %v2537, %v2382
  %v2539 = vadd.f32 %v2538, %v2390
  %v2540 = vadd.f32 %v2539, %v2398
  %v2541 = vrot.slane %v2540, 4
  %v2542 = vadd.f32 %v2540, %v2541
  %v2543 = vrot.slane %v2542, 2
  %v2544 = vadd.f32 %v2542, %v2543
  %v2545 = vrot.slane %v2544, 1
  %v2546 = vadd.f32 %v2544, %v2545
  %v2547 = vadd.f32 %v2279, %v2287
  %v2548 = vadd.f32 %v2547, %v2295
  %v2549 = vadd.f32 %v2548, %v2303
  %v2550 = vadd.f32 %v2549, %v2311
  %v2551 = vadd.f32 %v2550, %v2319
  %v2552 = vadd.f32 %v2551, %v2327
  %v2553 = vadd.f32 %v2552, %v2335
  %v2554 = vadd.f32 %v2553, %v2343
  %v2555 = vadd.f32 %v2554, %v2351
  %v2556 = vadd.f32 %v2555, %v2359
  %v2557 = vadd.f32 %v2556, %v2367
  %v2558 = vadd.f32 %v2557, %v2375
  %v2559 = vadd.f32 %v2558, %v2383
  %v2560 = vadd.f32 %v2559, %v2391
  %v2561 = vadd.f32 %v2560, %v2399
  %v2562 = vrot.slane %v2561, 4
  %v2563 = vadd.f32 %v2561, %v2562
  %v2564 = vrot.slane %v2563, 2
  %v2565 = vadd.f32 %v2563, %v2564
  %v2566 = vrot.slane %v2565, 1
  %v2567 = vadd.f32 %v2565, %v2566
  %s2568 = sld [smem:[#allocation2]]
  %v2569 = vstv %s2568
  %v2570 = vadd.f32 %v2420, %v2569
  %v2571 = vadd.f32 %v2441, %v2569
  %v2572 = vadd.f32 %v2462, %v2569
  %v2573 = vadd.f32 %v2483, %v2569
  %v2574 = vadd.f32 %v2504, %v2569
  %v2575 = vadd.f32 %v2525, %v2569
  %v2576 = vadd.f32 %v2546, %v2569
  %v2577 = vadd.f32 %v2567, %v2569
  %v2578 = vxor.u32 %v2570, 2147483648
  %v2579 = vxor.u32 %v2571, 2147483648
  %v2580 = vxor.u32 %v2572, 2147483648
  %v2581 = vxor.u32 %v2573, 2147483648
  %v2582 = vxor.u32 %v2574, 2147483648
  %v2583 = vxor.u32 %v2575, 2147483648
  %v2584 = vxor.u32 %v2576, 2147483648
  %v2585 = vxor.u32 %v2577, 2147483648
  %v2586 = vmul.f32 %v2578, 1.442695
  %v2587 = vpow.pop %v2586
  %v2588 = vmul.f32 %v2579, 1.442695
  %v2589 = vpow.pop %v2588
  %v2590 = vmul.f32 %v2580, 1.442695
  %v2591 = vpow.pop %v2590
  %v2592 = vmul.f32 %v2581, 1.442695
  %v2593 = vpow.pop %v2592
  %v2594 = vmul.f32 %v2582, 1.442695
  %v2595 = vpow.pop %v2594
  %v2596 = vmul.f32 %v2583, 1.442695
  %v2597 = vpow.pop %v2596
  %v2598 = vmul.f32 %v2584, 1.442695
  %v2599 = vpow.pop %v2598
  %v2600 = vmul.f32 %v2585, 1.442695
  %v2601 = vpow.pop %v2600
  %v2602 = vadd.f32 %v2587, 1.0
  %v2603 = vadd.f32 %v2589, 1.0
  %v2604 = vadd.f32 %v2591, 1.0
  %v2605 = vadd.f32 %v2593, 1.0
  %v2606 = vadd.f32 %v2595, 1.0
  %v2607 = vadd.f32 %v2597, 1.0
  %v2608 = vadd.f32 %v2599, 1.0
  %v2609 = vadd.f32 %v2601, 1.0
  %v2610 = vrcp.pop %v2602
  %v2611 = vmul.f32 1.0, %v2610
  %v2612 = vrcp.pop %v2603
  %v2613 = vmul.f32 1.0, %v2612
  %v2614 = vrcp.pop %v2604
  %v2615 = vmul.f32 1.0, %v2614
  %v2616 = vrcp.pop %v2605
  %v2617 = vmul.f32 1.0, %v2616
  %v2618 = vrcp.pop %v2606
  %v2619 = vmul.f32 1.0, %v2618
  %v2620 = vrcp.pop %v2607
  %v2621 = vmul.f32 1.0, %v2620
  %v2622 = vrcp.pop %v2608
  %v2623 = vmul.f32 1.0, %v2622
  %v2624 = vrcp.pop %v2609
  %v2625 = vmul.f32 1.0, %v2624
  %v2634 = vcombine.low %v2611, %v2613
  %v2635 = vcombine.low %v2615, %v2617
  %v2636 = vcombine.low %v2619, %v2621
  %v2637 = vcombine.low %v2623, %v2625
  %v2639 = vunpack.c.l.s4 1966171168
  %v2640 = vunpack.c.0.s8 %v2639
  %v2641 = vlaneseq
  %v2642 = vshrl.u32 %v2641, 7
  %v2643 = vsub.s32 %v2640, %v2642
  %v2644 = vrot.slane %v2634, %v2643
  %v2646 = vunpack.c.l.s4 1966171168
  %v2647 = vunpack.c.0.s8 %v2646
  %v2648 = vlaneseq
  %v2649 = vshrl.u32 %v2648, 7
  %v2650 = vsub.s32 %v2647, %v2649
  %v2651 = vrot.slane %v2635, %v2650
  %v2653 = vunpack.c.l.s4 1966171168
  %v2654 = vunpack.c.0.s8 %v2653
  %v2655 = vlaneseq
  %v2656 = vshrl.u32 %v2655, 7
  %v2657 = vsub.s32 %v2654, %v2656
  %v2658 = vrot.slane %v2636, %v2657
  %v2660 = vunpack.c.l.s4 1966171168
  %v2661 = vunpack.c.0.s8 %v2660
  %v2662 = vlaneseq
  %v2663 = vshrl.u32 %v2662, 7
  %v2664 = vsub.s32 %v2661, %v2663
  %v2665 = vrot.slane %v2637, %v2664
  %v2666 = vcombine.low %v2644, %v2651
  %v2667 = vcombine.low %v2658, %v2665
  %v2669 = vunpack.c.l.s4 1966171168
  %v2670 = vunpack.c.0.s8 %v2669
  %v2671 = vlaneseq
  %v2672 = vshrl.u32 %v2671, 7
  %v2673 = vsub.s32 %v2670, %v2672
  %v2674 = vrot.slane %v2666, %v2673
  %v2676 = vunpack.c.l.s4 1966171168
  %v2677 = vunpack.c.0.s8 %v2676
  %v2678 = vlaneseq
  %v2679 = vshrl.u32 %v2678, 7
  %v2680 = vsub.s32 %v2677, %v2679
  %v2681 = vrot.slane %v2667, %v2680
  %v2682 = vcombine.low %v2674, %v2681
  %2684 = vst [vmem:[%s7] sm:$0xff] %v2682
  // Predicated region
  $region30: #{discriminator_b1_forward.1} parent=0 // pred_check
    _
  $region31: #{discriminator_b1_forward.1} parent=0 // pred_check_branch
    %2686 = sbr.rel (0) target = $region33
  $region32: #{discriminator_b1_forward.1} parent=0 // pred_region
    _
  $region33: #{discriminator_b1_forward.1} parent=0 // pred_fallthru
    _
  // Predicated region
  $region34: #{discriminator_b1_forward.1} parent=0 // pred_check
    _
  $region35: #{discriminator_b1_forward.1} parent=0 // pred_check_branch
    %2688 = sbr.rel (0) target = $region37
  $region36: #{discriminator_b1_forward.1} parent=0 // pred_region
    _
  $region37: #{discriminator_b1_forward.1} parent=0 // pred_fallthru
    _

</llo_original>
